<compile_context>
chip_gen: v6e
topology: v6e:2x2x1
jax: 0.10.0
libtpu: 0.0.40
codegen_flags: <defaults>
</compile_context>

<pallas_src>
import jax
import jax.numpy as jnp
from jax.experimental import pallas as pl
from jax.experimental.pallas import tpu as pltpu

EPS = 1e-5


# ----------------------------------------------------------------------------
# in-kernel helpers
# ----------------------------------------------------------------------------
def _conv3x3_lane(x_f32, big_ref, pad_ref):
    """3x3 conv with the width axis folded into lanes.

    x_f32  : (B, H, W*Ci) f32 value — activation in lane-dense layout
    big_ref: (3, W*Ci, W*Co) bf16   — per-dy block-banded weights (dx folded in)
    pad_ref: (B, H+2, W*Ci) f32 VMEM scratch — 2-row vertical halo
    returns: (B*H, W*Co) f32 accumulator
    """
    B, H, WCi = x_f32.shape
    WCo = big_ref.shape[-1]
    zrow = jnp.zeros((B, 1, WCi), pad_ref.dtype)
    pad_ref[:, 0:1, :] = zrow                      # dense full-lane row stores
    pad_ref[:, H + 1:H + 2, :] = zrow
    pad_ref[:, 1:H + 1, :] = x_f32
    acc = jnp.zeros((B * H, WCo), jnp.float32)
    for dy in range(3):
        slab = pad_ref[:, dy:dy + H, :].reshape(B * H, WCi).astype(jnp.bfloat16)
        acc = acc + jnp.dot(slab, big_ref[dy], preferred_element_type=jnp.float32)
    return acc


def _store_stats(st_ref, acc):
    """One-pass (sum, sum-of-squares) partials, lane layout = w*C + c."""
    WCo = st_ref.shape[-1]
    st_ref[:, 0:1, :] = jnp.sum(acc, axis=0, keepdims=True).reshape(1, 1, WCo)
    st_ref[:, 1:2, :] = jnp.sum(acc * acc, axis=0, keepdims=True).reshape(1, 1, WCo)


# ----------------------------------------------------------------------------
# kernels
# ----------------------------------------------------------------------------
def _conv1_stats_kernel(x_ref, big_ref, y_ref, st_ref, pad_ref):
    # x_ref: (B,H,W*Ci) f32  big_ref: (3,W*Ci,W*Co) bf16
    # y_ref: (B,H,W*Co) bf16 st_ref: (1,2,W*Co) f32
    B, H, WCo = y_ref.shape
    acc = _conv3x3_lane(x_ref[...], big_ref, pad_ref)
    y_ref[...] = acc.reshape(B, H, WCo).astype(y_ref.dtype)
    _store_stats(st_ref, acc)


def _bn_relu_conv_stats_kernel(y1_ref, s_ref, t_ref, big_ref, y2_ref, st_ref, pad_ref):
    # BN1 (global stats, folded into scale/shift) + ReLU, then conv2 + partials.
    B, H, WCo = y2_ref.shape
    WC = y1_ref.shape[-1]
    s = s_ref[...].reshape(1, 1, WC)
    t = t_ref[...].reshape(1, 1, WC)
    h = jnp.maximum(y1_ref[...].astype(jnp.float32) * s + t, 0.0)
    acc = _conv3x3_lane(h, big_ref, pad_ref)
    y2_ref[...] = acc.reshape(B, H, WCo).astype(y2_ref.dtype)
    _store_stats(st_ref, acc)


def _bn_relu_residual_kernel(x_ref, y2_ref, s_ref, t_ref, out_ref):
    # BN2 + ReLU + identity skip + final ReLU (output aliases x's HBM buffer).
    WC = out_ref.shape[-1]
    s = s_ref[...].reshape(1, 1, WC)
    t = t_ref[...].reshape(1, 1, WC)
    h = jnp.maximum(y2_ref[...].astype(jnp.float32) * s + t, 0.0)
    out_ref[...] = jnp.maximum(x_ref[...] + h, 0.0)


# ----------------------------------------------------------------------------
# wrapper-side helpers
# ----------------------------------------------------------------------------
def _images_per_step(n_images):
    # keep >= 4 parallel grid steps when possible (v7x megacore + pipelining);
    # cap the per-step batch at 8 images.
    for b in (8, 4, 2):
        if n_images % b == 0 and n_images // b >= 4:
            return b
    return 1


def _lane_conv_weights(w_hwio, width):
    """(3,3,Ci,Co) HWIO -> (3, W*Ci, W*Co) bf16 block-banded lane weights.

    big[dy, v*Ci+ci, w*Co+co] = w[dy, v-w+1, ci, co] if 0 <= v-w+1 < 3 else 0,
    so (row_slab @ big[dy]) performs the dx sweep of the 3x3 conv with the
    width-axis zero padding folded into the band structure.  Column order
    (w*Co + co) matches the lane-dense activation layout.
    """
    kh, kw, ci, co = w_hwio.shape
    assert (kh, kw) == (3, 3)
    v = jnp.arange(width)[:, None, None]          # input column
    wc = jnp.arange(width)[None, :, None]         # output column
    dx = jnp.arange(3)[None, None, :]
    sel = (v == wc + dx - 1).astype(jnp.float32)  # (W, W, 3) band selector
    big = jnp.einsum("vwd,ydio->yviwo", sel, w_hwio.astype(jnp.float32))
    return big.reshape(3, width * ci, width * co).astype(jnp.bfloat16)


def _nbytes(shape, dtype):
    n = 1
    for d in shape:
        n *= int(d)
    return n * jnp.dtype(dtype).itemsize


# ----------------------------------------------------------------------------
# wrapper
# ----------------------------------------------------------------------------
@jax.jit
def residual_block_forward(x_nchw, w1, g1, b1, w2, g2, b2):
    """same_shape=True residual block. x_nchw: (N,C,H,W) f32; weights HWIO; returns NCHW."""
    x = jnp.transpose(x_nchw, (0, 2, 3, 1)).astype(jnp.float32)     # NHWC
    N, H, W, Cin = x.shape
    Cout = w1.shape[-1]
    assert Cin == Cout, "same_shape=True requires in_channel == out_channel"
    WCi, WCo = W * Cin, W * Cout

    x_lane = x.reshape(N, H, WCi)                 # lane-dense activation layout
    big1 = _lane_conv_weights(w1, W)
    big2 = _lane_conv_weights(w2, W)

    B = _images_per_step(N)
    steps = N // B
    cnt = float(N * H * W)

    act_in_spec = pl.BlockSpec((B, H, WCi), lambda n: (n, 0, 0))
    act_out_spec = pl.BlockSpec((B, H, WCo), lambda n: (n, 0, 0))
    big_spec = pl.BlockSpec((3, WCi, WCo), lambda n: (0, 0, 0))
    vec_spec = pl.BlockSpec((1, WCo), lambda n: (0, 0))
    st_spec = pl.BlockSpec((1, 2, WCo), lambda n: (n, 0, 0))

    # VMEM limit derived from the actual per-step blocks (double-buffered) + scratch.
    blk = (_nbytes((B, H, WCi), jnp.float32)          # x / out block
           + _nbytes((B, H, WCo), jnp.float32)        # f32 out block (pass 3)
           + _nbytes((B, H, WCo), jnp.bfloat16)       # y1/y2 block
           + _nbytes((3, WCi, WCo), jnp.bfloat16)     # banded weights
           + _nbytes((1, 2, WCo), jnp.float32)        # stats block
           + 2 * _nbytes((1, WCo), jnp.float32))      # scale/shift
    scratch_bytes = _nbytes((B, H + 2, WCi), jnp.float32)
    vmem_limit = int(max(16 * 2**20, min(48 * 2**20, 4 * (2 * blk + scratch_bytes))))
    cparams = pltpu.CompilerParams(dimension_semantics=("parallel",),
                                   vmem_limit_bytes=vmem_limit)

    def bn_affine(st, g, b):
        # reduce per-step (sum, sumsq) partials over steps and over w -> per channel
        tot = jnp.sum(st, axis=0).reshape(2, W, Cout).sum(axis=1)    # (2, Cout)
        mean = tot[0] / cnt
        var = jnp.maximum(tot[1] / cnt - mean * mean, 0.0)
        sc = g * jax.lax.rsqrt(var + EPS)
        sh = b - mean * sc
        # tile per-channel affine across the w*C lane layout
        return jnp.tile(sc, W).reshape(1, WCo), jnp.tile(sh, W).reshape(1, WCo)

    # ---- pass 1: conv1 + per-step (sum, sumsq) partials ---------------------
    y1, st1 = pl.pallas_call(
        _conv1_stats_kernel,
        grid=(steps,),
        in_specs=[act_in_spec, big_spec],
        out_specs=(act_out_spec, st_spec),
        out_shape=(jax.ShapeDtypeStruct((N, H, WCo), jnp.bfloat16),
                   jax.ShapeDtypeStruct((steps, 2, WCo), jnp.float32)),
        scratch_shapes=[pltpu.VMEM((B, H + 2, WCi), jnp.float32)],
        compiler_params=cparams,
    )(x_lane, big1)
    scale1, shift1 = bn_affine(st1, g1, b1)

    # ---- pass 2: BN1 + ReLU + conv2 + partials ------------------------------
    y2, st2 = pl.pallas_call(
        _bn_relu_conv_stats_kernel,
        grid=(steps,),
        in_specs=[act_out_spec, vec_spec, vec_spec, big_spec],
        out_specs=(act_out_spec, st_spec),
        out_shape=(jax.ShapeDtypeStruct((N, H, WCo), jnp.bfloat16),
                   jax.ShapeDtypeStruct((steps, 2, WCo), jnp.float32)),
        scratch_shapes=[pltpu.VMEM((B, H + 2, WCo), jnp.float32)],
        compiler_params=cparams,
    )(y1, scale1, shift1, big2)
    scale2, shift2 = bn_affine(st2, g2, b2)

    # ---- pass 3: BN2 + ReLU + identity skip + final ReLU --------------------
    out_lane = pl.pallas_call(
        _bn_relu_residual_kernel,
        grid=(steps,),
        in_specs=[act_in_spec, act_out_spec, vec_spec, vec_spec],
        out_specs=act_out_spec,
        out_shape=jax.ShapeDtypeStruct((N, H, WCo), jnp.float32),
        input_output_aliases={0: 0},            # reuse x_lane's HBM buffer
        compiler_params=cparams,
    )(x_lane, y2, scale2, shift2)

    return jnp.transpose(out_lane.reshape(N, H, W, Cout), (0, 3, 1, 2))   # NCHW


# ----------------------------------------------------------------------------
# pure-JAX reference (models bf16 conv operands, f32 accumulation/BN stats,
# and the bf16 rounding of the stored y1/y2 intermediates)
# ----------------------------------------------------------------------------
def _reference_forward(x_nchw, w1, g1, b1, w2, g2, b2):
    def conv3x3(x_nhwc, w):
        N, H, W, Ci = x_nhwc.shape
        Co = w.shape[-1]
        xb = x_nhwc.astype(jnp.bfloat16).astype(jnp.float32)
        wb = w.astype(jnp.bfloat16).astype(jnp.float32)
        xp = jnp.pad(xb, ((0, 0), (1, 1), (1, 1), (0, 0)))
        acc = jnp.zeros((N, H, W, Co), jnp.float32)
        for dy in range(3):
            for dx in range(3):
                acc = acc + jnp.einsum(
                    "nhwc,co->nhwo",
                    xp[:, dy:dy + H, dx:dx + W, :], wb[dy, dx],
                    precision=jax.lax.Precision.HIGHEST)
        return acc

    def bn_relu(y_f32, g, b):
        # stats from the f32 accumulator; normalization applied to the
        # bf16-rounded stored intermediate (mirrors the kernel)
        m = jnp.mean(y_f32, axis=(0, 1, 2))
        v = jnp.maximum(jnp.mean(y_f32 * y_f32, axis=(0, 1, 2)) - m * m, 0.0)
        yq = y_f32.astype(jnp.bfloat16).astype(jnp.float32)
        return jnp.maximum((yq - m) * jax.lax.rsqrt(v + EPS) * g + b, 0.0)

    x = jnp.transpose(x_nchw, (0, 2, 3, 1)).astype(jnp.float32)
    h = bn_relu(conv3x3(x, w1), g1, b1)
    h = bn_relu(conv3x3(h, w2), g2, b2)
    out = jnp.maximum(x + h, 0.0)
    return jnp.transpose(out, (0, 3, 1, 2))


if __name__ == "__main__":
    key = jax.random.PRNGKey(0)
    k_x, k_w1, k_w2, k_g1, k_b1, k_g2, k_b2 = jax.random.split(key, 7)

    N, C, H, W = 2, 8, 16, 16                 # same_shape=True -> Cin == Cout == 8, W*C = 128
    x = jax.random.normal(k_x, (N, C, H, W), jnp.float32)

    w1 = 0.1 * jax.random.normal(k_w1, (3, 3, C, C), jnp.float32)   # HWIO
    w2 = 0.1 * jax.random.normal(k_w2, (3, 3, C, C), jnp.float32)
    g1 = 1.0 + 0.1 * jax.random.normal(k_g1, (C,), jnp.float32)
    b1 = 0.1 * jax.random.normal(k_b1, (C,), jnp.float32)
    g2 = 1.0 + 0.1 * jax.random.normal(k_g2, (C,), jnp.float32)
    b2 = 0.1 * jax.random.normal(k_b2, (C,), jnp.float32)

    out = residual_block_forward(x, w1, g1, b1, w2, g2, b2)
    out = jax.block_until_ready(out)

    ref = _reference_forward(x, w1, g1, b1, w2, g2, b2)
    assert out.shape == (N, C, H, W)
    max_diff = float(jnp.max(jnp.abs(out - ref)))
    assert jnp.allclose(out, ref, atol=1e-2, rtol=1e-2), (
        "mismatch vs reference, max abs diff = %g" % max_diff)

    print("KERNEL_OK")
</pallas_src>

<mosaic_0001>
module attributes {stable_mosaic.version = 11 : i64} {
  func.func @_conv1_stats_kernel(%arg0: i32, %arg1: memref<1x16x128xf32, #tpu.memory_space<vmem>>, %arg2: memref<3x128x128xbf16, #tpu.memory_space<vmem>>, %arg3: memref<1x16x128xbf16, #tpu.memory_space<vmem>>, %arg4: memref<1x2x128xf32, #tpu.memory_space<vmem>>, %arg5: memref<1x18x128xf32, #tpu.memory_space<vmem>>) attributes {dimension_semantics = [#tpu.dimension_semantics<parallel>], iteration_bounds = array<i64: 2>, scalar_prefetch = 0 : i64, scratch_operands = 1 : i64, tpu.core_type = #tpu.core_type<tc>, window_params = [{transform_indices = @transform_0, window_bounds = array<i64: 1, 16, 128>}, {pipeline_mode = #tpu.pipeline_mode<synchronous>, transform_indices = @transform_1, window_bounds = array<i64: 3, 128, 128>}, {transform_indices = @transform_2, window_bounds = array<i64: 1, 16, 128>}, {transform_indices = @transform_3, window_bounds = array<i64: 1, 2, 128>}]} {
    %c0 = arith.constant 0 : index
    %c0_0 = arith.constant 0 : index
    %c0_1 = arith.constant 0 : index
    %0 = vector.load %arg1[%c0, %c0_0, %c0_1] : memref<1x16x128xf32, #tpu.memory_space<vmem>>, vector<1x16x128xf32>
    %cst = arith.constant 0.000000e+00 : f32
    %1 = vector.broadcast %cst : f32 to vector<1x1x128xf32>
    %c0_2 = arith.constant 0 : index
    %c0_3 = arith.constant 0 : index
    %c0_4 = arith.constant 0 : index
    %2 = vector.load %arg5[%c0_2, %c0_3, %c0_4] : memref<1x18x128xf32, #tpu.memory_space<vmem>>, vector<1x1x128xf32>
    tpu.vector_store %arg5[%c0_2, %c0_3, %c0_4], %1 {strides = array<i32>} : memref<1x18x128xf32, #tpu.memory_space<vmem>>, vector<1x1x128xf32>,
    %c0_5 = arith.constant 0 : index
    %c17 = arith.constant 17 : index
    %c0_6 = arith.constant 0 : index
    %3 = vector.load %arg5[%c0_5, %c17, %c0_6] : memref<1x18x128xf32, #tpu.memory_space<vmem>>, vector<1x1x128xf32>
    tpu.vector_store %arg5[%c0_5, %c17, %c0_6], %1 {strides = array<i32>} : memref<1x18x128xf32, #tpu.memory_space<vmem>>, vector<1x1x128xf32>,
    %c0_7 = arith.constant 0 : index
    %c1 = arith.constant 1 : index
    %c0_8 = arith.constant 0 : index
    %4 = vector.load %arg5[%c0_7, %c1, %c0_8] : memref<1x18x128xf32, #tpu.memory_space<vmem>>, vector<1x16x128xf32>
    tpu.vector_store %arg5[%c0_7, %c1, %c0_8], %0 {strides = array<i32>} : memref<1x18x128xf32, #tpu.memory_space<vmem>>, vector<1x16x128xf32>,
    %cst_9 = arith.constant 0.000000e+00 : f32
    %5 = vector.broadcast %cst_9 : f32 to vector<16x128xf32>
    %c0_10 = arith.constant 0 : index
    %c0_11 = arith.constant 0 : index
    %c0_12 = arith.constant 0 : index
    %6 = vector.load %arg5[%c0_10, %c0_11, %c0_12] : memref<1x18x128xf32, #tpu.memory_space<vmem>>, vector<1x16x128xf32>
    %7 = vector.shape_cast %6 : vector<1x16x128xf32> to vector<16x128xf32>
    %8 = arith.truncf %7 : vector<16x128xf32> to vector<16x128xbf16>
    %c0_13 = arith.constant 0 : index
    %c0_14 = arith.constant 0 : index
    %c0_15 = arith.constant 0 : index
    %9 = vector.load %arg2[%c0_13, %c0_14, %c0_15] : memref<3x128x128xbf16, #tpu.memory_space<vmem>>, vector<1x128x128xbf16>
    %10 = vector.shape_cast %9 : vector<1x128x128xbf16> to vector<128x128xbf16>
    %cst_16 = arith.constant dense<0.000000e+00> : vector<16x128xf32>
    %11 = tpu.matmul %8, %10, %cst_16 {dimension_numbers = #tpu.dot_dimension_numbers<[1], [0], [0], [1], [0, 0, 1, 1], [], []>} : vector<16x128xbf16>, vector<128x128xbf16>, vector<16x128xf32> -> vector<16x128xf32>
    %12 = arith.addf %5, %11 : vector<16x128xf32>
    %c0_17 = arith.constant 0 : index
    %c1_18 = arith.constant 1 : index
    %c0_19 = arith.constant 0 : index
    %13 = vector.load %arg5[%c0_17, %c1_18, %c0_19] : memref<1x18x128xf32, #tpu.memory_space<vmem>>, vector<1x16x128xf32>
    %14 = vector.shape_cast %13 : vector<1x16x128xf32> to vector<16x128xf32>
    %15 = arith.truncf %14 : vector<16x128xf32> to vector<16x128xbf16>
    %c1_20 = arith.constant 1 : index
    %c0_21 = arith.constant 0 : index
    %c0_22 = arith.constant 0 : index
    %16 = vector.load %arg2[%c1_20, %c0_21, %c0_22] : memref<3x128x128xbf16, #tpu.memory_space<vmem>>, vector<1x128x128xbf16>
    %17 = vector.shape_cast %16 : vector<1x128x128xbf16> to vector<128x128xbf16>
    %cst_23 = arith.constant dense<0.000000e+00> : vector<16x128xf32>
    %18 = tpu.matmul %15, %17, %cst_23 {dimension_numbers = #tpu.dot_dimension_numbers<[1], [0], [0], [1], [0, 0, 1, 1], [], []>} : vector<16x128xbf16>, vector<128x128xbf16>, vector<16x128xf32> -> vector<16x128xf32>
    %19 = arith.addf %12, %18 : vector<16x128xf32>
    %c0_24 = arith.constant 0 : index
    %c2 = arith.constant 2 : index
    %c0_25 = arith.constant 0 : index
    %20 = vector.load %arg5[%c0_24, %c2, %c0_25] : memref<1x18x128xf32, #tpu.memory_space<vmem>>, vector<1x16x128xf32>
    %21 = vector.shape_cast %20 : vector<1x16x128xf32> to vector<16x128xf32>
    %22 = arith.truncf %21 : vector<16x128xf32> to vector<16x128xbf16>
    %c2_26 = arith.constant 2 : index
    %c0_27 = arith.constant 0 : index
    %c0_28 = arith.constant 0 : index
    %23 = vector.load %arg2[%c2_26, %c0_27, %c0_28] : memref<3x128x128xbf16, #tpu.memory_space<vmem>>, vector<1x128x128xbf16>
    %24 = vector.shape_cast %23 : vector<1x128x128xbf16> to vector<128x128xbf16>
    %cst_29 = arith.constant dense<0.000000e+00> : vector<16x128xf32>
    %25 = tpu.matmul %22, %24, %cst_29 {dimension_numbers = #tpu.dot_dimension_numbers<[1], [0], [0], [1], [0, 0, 1, 1], [], []>} : vector<16x128xbf16>, vector<128x128xbf16>, vector<16x128xf32> -> vector<16x128xf32>
    %26 = arith.addf %19, %25 : vector<16x128xf32>
    %27 = vector.shape_cast %26 : vector<16x128xf32> to vector<1x16x128xf32>
    %28 = arith.truncf %27 : vector<1x16x128xf32> to vector<1x16x128xbf16>
    %c0_30 = arith.constant 0 : index
    %c0_31 = arith.constant 0 : index
    %c0_32 = arith.constant 0 : index
    %29 = vector.load %arg3[%c0_30, %c0_31, %c0_32] : memref<1x16x128xbf16, #tpu.memory_space<vmem>>, vector<1x16x128xbf16>
    tpu.vector_store %arg3[%c0_30, %c0_31, %c0_32], %28 {strides = array<i32>} : memref<1x16x128xbf16, #tpu.memory_space<vmem>>, vector<1x16x128xbf16>,
    %cst_33 = arith.constant dense<0.000000e+00> : vector<128xf32>
    %30 = vector.multi_reduction <add>, %26, %cst_33 [0] : vector<16x128xf32> to vector<128xf32>
    %31 = vector.shape_cast %30 : vector<128xf32> to vector<1x128xf32>
    %32 = vector.shape_cast %31 : vector<1x128xf32> to vector<1x1x128xf32>
    %c0_34 = arith.constant 0 : index
    %c0_35 = arith.constant 0 : index
    %c0_36 = arith.constant 0 : index
    %33 = vector.load %arg4[%c0_34, %c0_35, %c0_36] : memref<1x2x128xf32, #tpu.memory_space<vmem>>, vector<1x1x128xf32>
    tpu.vector_store %arg4[%c0_34, %c0_35, %c0_36], %32 {strides = array<i32>} : memref<1x2x128xf32, #tpu.memory_space<vmem>>, vector<1x1x128xf32>,
    %34 = arith.mulf %26, %26 : vector<16x128xf32>
    %cst_37 = arith.constant dense<0.000000e+00> : vector<128xf32>
    %35 = vector.multi_reduction <add>, %34, %cst_37 [0] : vector<16x128xf32> to vector<128xf32>
    %36 = vector.shape_cast %35 : vector<128xf32> to vector<1x128xf32>
    %37 = vector.shape_cast %36 : vector<1x128xf32> to vector<1x1x128xf32>
    %c0_38 = arith.constant 0 : index
    %c1_39 = arith.constant 1 : index
    %c0_40 = arith.constant 0 : index
    %38 = vector.load %arg4[%c0_38, %c1_39, %c0_40] : memref<1x2x128xf32, #tpu.memory_space<vmem>>, vector<1x1x128xf32>
    tpu.vector_store %arg4[%c0_38, %c1_39, %c0_40], %37 {strides = array<i32>} : memref<1x2x128xf32, #tpu.memory_space<vmem>>, vector<1x1x128xf32>,
    return
  }
  func.func @transform_0(%arg0: i32) -> (i32, i32, i32) {
    %c0_i32 = arith.constant 0 : i32
    %c0_i32_0 = arith.constant 0 : i32
    %c0_i32_1 = arith.constant 0 : i32
    return %arg0, %c0_i32, %c0_i32_0 : i32, i32, i32
  }
  func.func @transform_1(%arg0: i32) -> (i32, i32, i32) {
    %c0_i32 = arith.constant 0 : i32
    %c0_i32_0 = arith.constant 0 : i32
    %c0_i32_1 = arith.constant 0 : i32
    %c0_i32_2 = arith.constant 0 : i32
    return %c0_i32, %c0_i32_0, %c0_i32_1 : i32, i32, i32
  }
  func.func @transform_2(%arg0: i32) -> (i32, i32, i32) {
    %c0_i32 = arith.constant 0 : i32
    %c0_i32_0 = arith.constant 0 : i32
    %c0_i32_1 = arith.constant 0 : i32
    return %arg0, %c0_i32, %c0_i32_0 : i32, i32, i32
  }
  func.func @transform_3(%arg0: i32) -> (i32, i32, i32) {
    %c0_i32 = arith.constant 0 : i32
    %c0_i32_0 = arith.constant 0 : i32
    %c0_i32_1 = arith.constant 0 : i32
    return %arg0, %c0_i32, %c0_i32_0 : i32, i32, i32
  }
}

module attributes {stable_mosaic.version = 11 : i64} {
  func.func @_bn_relu_conv_stats_kernel(%arg0: i32, %arg1: memref<1x16x128xbf16, #tpu.memory_space<vmem>>, %arg2: memref<1x128xf32, #tpu.memory_space<vmem>>, %arg3: memref<1x128xf32, #tpu.memory_space<vmem>>, %arg4: memref<3x128x128xbf16, #tpu.memory_space<vmem>>, %arg5: memref<1x16x128xbf16, #tpu.memory_space<vmem>>, %arg6: memref<1x2x128xf32, #tpu.memory_space<vmem>>, %arg7: memref<1x18x128xf32, #tpu.memory_space<vmem>>) attributes {dimension_semantics = [#tpu.dimension_semantics<parallel>], iteration_bounds = array<i64: 2>, scalar_prefetch = 0 : i64, scratch_operands = 1 : i64, tpu.core_type = #tpu.core_type<tc>, window_params = [{transform_indices = @transform_0, window_bounds = array<i64: 1, 16, 128>}, {pipeline_mode = #tpu.pipeline_mode<synchronous>, transform_indices = @transform_1, window_bounds = array<i64: 1, 128>}, {pipeline_mode = #tpu.pipeline_mode<synchronous>, transform_indices = @transform_2, window_bounds = array<i64: 1, 128>}, {pipeline_mode = #tpu.pipeline_mode<synchronous>, transform_indices = @transform_3, window_bounds = array<i64: 3, 128, 128>}, {transform_indices = @transform_4, window_bounds = array<i64: 1, 16, 128>}, {transform_indices = @transform_5, window_bounds = array<i64: 1, 2, 128>}]} {
    %c0 = arith.constant 0 : index
    %c0_0 = arith.constant 0 : index
    %0 = vector.load %arg2[%c0, %c0_0] : memref<1x128xf32, #tpu.memory_space<vmem>>, vector<1x128xf32>
    %1 = vector.shape_cast %0 : vector<1x128xf32> to vector<1x1x128xf32>
    %c0_1 = arith.constant 0 : index
    %c0_2 = arith.constant 0 : index
    %2 = vector.load %arg3[%c0_1, %c0_2] : memref<1x128xf32, #tpu.memory_space<vmem>>, vector<1x128xf32>
    %3 = vector.shape_cast %2 : vector<1x128xf32> to vector<1x1x128xf32>
    %c0_3 = arith.constant 0 : index
    %c0_4 = arith.constant 0 : index
    %c0_5 = arith.constant 0 : index
    %4 = vector.load %arg1[%c0_3, %c0_4, %c0_5] : memref<1x16x128xbf16, #tpu.memory_space<vmem>>, vector<1x16x128xbf16>
    %5 = arith.extf %4 : vector<1x16x128xbf16> to vector<1x16x128xf32>
    %6 = vector.broadcast %1 : vector<1x1x128xf32> to vector<1x16x128xf32>
    %7 = arith.mulf %5, %6 : vector<1x16x128xf32>
    %8 = vector.broadcast %3 : vector<1x1x128xf32> to vector<1x16x128xf32>
    %9 = arith.addf %7, %8 : vector<1x16x128xf32>
    %cst = arith.constant 0.000000e+00 : f32
    %10 = vector.broadcast %cst : f32 to vector<1x16x128xf32>
    %11 = arith.maximumf %9, %10 : vector<1x16x128xf32>
    %cst_6 = arith.constant 0.000000e+00 : f32
    %12 = vector.broadcast %cst_6 : f32 to vector<1x1x128xf32>
    %c0_7 = arith.constant 0 : index
    %c0_8 = arith.constant 0 : index
    %c0_9 = arith.constant 0 : index
    %13 = vector.load %arg7[%c0_7, %c0_8, %c0_9] : memref<1x18x128xf32, #tpu.memory_space<vmem>>, vector<1x1x128xf32>
    tpu.vector_store %arg7[%c0_7, %c0_8, %c0_9], %12 {strides = array<i32>} : memref<1x18x128xf32, #tpu.memory_space<vmem>>, vector<1x1x128xf32>,
    %c0_10 = arith.constant 0 : index
    %c17 = arith.constant 17 : index
    %c0_11 = arith.constant 0 : index
    %14 = vector.load %arg7[%c0_10, %c17, %c0_11] : memref<1x18x128xf32, #tpu.memory_space<vmem>>, vector<1x1x128xf32>
    tpu.vector_store %arg7[%c0_10, %c17, %c0_11], %12 {strides = array<i32>} : memref<1x18x128xf32, #tpu.memory_space<vmem>>, vector<1x1x128xf32>,
    %c0_12 = arith.constant 0 : index
    %c1 = arith.constant 1 : index
    %c0_13 = arith.constant 0 : index
    %15 = vector.load %arg7[%c0_12, %c1, %c0_13] : memref<1x18x128xf32, #tpu.memory_space<vmem>>, vector<1x16x128xf32>
    tpu.vector_store %arg7[%c0_12, %c1, %c0_13], %11 {strides = array<i32>} : memref<1x18x128xf32, #tpu.memory_space<vmem>>, vector<1x16x128xf32>,
    %cst_14 = arith.constant 0.000000e+00 : f32
    %16 = vector.broadcast %cst_14 : f32 to vector<16x128xf32>
    %c0_15 = arith.constant 0 : index
    %c0_16 = arith.constant 0 : index
    %c0_17 = arith.constant 0 : index
    %17 = vector.load %arg7[%c0_15, %c0_16, %c0_17] : memref<1x18x128xf32, #tpu.memory_space<vmem>>, vector<1x16x128xf32>
    %18 = vector.shape_cast %17 : vector<1x16x128xf32> to vector<16x128xf32>
    %19 = arith.truncf %18 : vector<16x128xf32> to vector<16x128xbf16>
    %c0_18 = arith.constant 0 : index
    %c0_19 = arith.constant 0 : index
    %c0_20 = arith.constant 0 : index
    %20 = vector.load %arg4[%c0_18, %c0_19, %c0_20] : memref<3x128x128xbf16, #tpu.memory_space<vmem>>, vector<1x128x128xbf16>
    %21 = vector.shape_cast %20 : vector<1x128x128xbf16> to vector<128x128xbf16>
    %cst_21 = arith.constant dense<0.000000e+00> : vector<16x128xf32>
    %22 = tpu.matmul %19, %21, %cst_21 {dimension_numbers = #tpu.dot_dimension_numbers<[1], [0], [0], [1], [0, 0, 1, 1], [], []>} : vector<16x128xbf16>, vector<128x128xbf16>, vector<16x128xf32> -> vector<16x128xf32>
    %23 = arith.addf %16, %22 : vector<16x128xf32>
    %c0_22 = arith.constant 0 : index
    %c1_23 = arith.constant 1 : index
    %c0_24 = arith.constant 0 : index
    %24 = vector.load %arg7[%c0_22, %c1_23, %c0_24] : memref<1x18x128xf32, #tpu.memory_space<vmem>>, vector<1x16x128xf32>
    %25 = vector.shape_cast %24 : vector<1x16x128xf32> to vector<16x128xf32>
    %26 = arith.truncf %25 : vector<16x128xf32> to vector<16x128xbf16>
    %c1_25 = arith.constant 1 : index
    %c0_26 = arith.constant 0 : index
    %c0_27 = arith.constant 0 : index
    %27 = vector.load %arg4[%c1_25, %c0_26, %c0_27] : memref<3x128x128xbf16, #tpu.memory_space<vmem>>, vector<1x128x128xbf16>
    %28 = vector.shape_cast %27 : vector<1x128x128xbf16> to vector<128x128xbf16>
    %cst_28 = arith.constant dense<0.000000e+00> : vector<16x128xf32>
    %29 = tpu.matmul %26, %28, %cst_28 {dimension_numbers = #tpu.dot_dimension_numbers<[1], [0], [0], [1], [0, 0, 1, 1], [], []>} : vector<16x128xbf16>, vector<128x128xbf16>, vector<16x128xf32> -> vector<16x128xf32>
    %30 = arith.addf %23, %29 : vector<16x128xf32>
    %c0_29 = arith.constant 0 : index
    %c2 = arith.constant 2 : index
    %c0_30 = arith.constant 0 : index
    %31 = vector.load %arg7[%c0_29, %c2, %c0_30] : memref<1x18x128xf32, #tpu.memory_space<vmem>>, vector<1x16x128xf32>
    %32 = vector.shape_cast %31 : vector<1x16x128xf32> to vector<16x128xf32>
    %33 = arith.truncf %32 : vector<16x128xf32> to vector<16x128xbf16>
    %c2_31 = arith.constant 2 : index
    %c0_32 = arith.constant 0 : index
    %c0_33 = arith.constant 0 : index
    %34 = vector.load %arg4[%c2_31, %c0_32, %c0_33] : memref<3x128x128xbf16, #tpu.memory_space<vmem>>, vector<1x128x128xbf16>
    %35 = vector.shape_cast %34 : vector<1x128x128xbf16> to vector<128x128xbf16>
    %cst_34 = arith.constant dense<0.000000e+00> : vector<16x128xf32>
    %36 = tpu.matmul %33, %35, %cst_34 {dimension_numbers = #tpu.dot_dimension_numbers<[1], [0], [0], [1], [0, 0, 1, 1], [], []>} : vector<16x128xbf16>, vector<128x128xbf16>, vector<16x128xf32> -> vector<16x128xf32>
    %37 = arith.addf %30, %36 : vector<16x128xf32>
    %38 = vector.shape_cast %37 : vector<16x128xf32> to vector<1x16x128xf32>
    %39 = arith.truncf %38 : vector<1x16x128xf32> to vector<1x16x128xbf16>
    %c0_35 = arith.constant 0 : index
    %c0_36 = arith.constant 0 : index
    %c0_37 = arith.constant 0 : index
    %40 = vector.load %arg5[%c0_35, %c0_36, %c0_37] : memref<1x16x128xbf16, #tpu.memory_space<vmem>>, vector<1x16x128xbf16>
    tpu.vector_store %arg5[%c0_35, %c0_36, %c0_37], %39 {strides = array<i32>} : memref<1x16x128xbf16, #tpu.memory_space<vmem>>, vector<1x16x128xbf16>,
    %cst_38 = arith.constant dense<0.000000e+00> : vector<128xf32>
    %41 = vector.multi_reduction <add>, %37, %cst_38 [0] : vector<16x128xf32> to vector<128xf32>
    %42 = vector.shape_cast %41 : vector<128xf32> to vector<1x128xf32>
    %43 = vector.shape_cast %42 : vector<1x128xf32> to vector<1x1x128xf32>
    %c0_39 = arith.constant 0 : index
    %c0_40 = arith.constant 0 : index
    %c0_41 = arith.constant 0 : index
    %44 = vector.load %arg6[%c0_39, %c0_40, %c0_41] : memref<1x2x128xf32, #tpu.memory_space<vmem>>, vector<1x1x128xf32>
    tpu.vector_store %arg6[%c0_39, %c0_40, %c0_41], %43 {strides = array<i32>} : memref<1x2x128xf32, #tpu.memory_space<vmem>>, vector<1x1x128xf32>,
    %45 = arith.mulf %37, %37 : vector<16x128xf32>
    %cst_42 = arith.constant dense<0.000000e+00> : vector<128xf32>
    %46 = vector.multi_reduction <add>, %45, %cst_42 [0] : vector<16x128xf32> to vector<128xf32>
    %47 = vector.shape_cast %46 : vector<128xf32> to vector<1x128xf32>
    %48 = vector.shape_cast %47 : vector<1x128xf32> to vector<1x1x128xf32>
    %c0_43 = arith.constant 0 : index
    %c1_44 = arith.constant 1 : index
    %c0_45 = arith.constant 0 : index
    %49 = vector.load %arg6[%c0_43, %c1_44, %c0_45] : memref<1x2x128xf32, #tpu.memory_space<vmem>>, vector<1x1x128xf32>
    tpu.vector_store %arg6[%c0_43, %c1_44, %c0_45], %48 {strides = array<i32>} : memref<1x2x128xf32, #tpu.memory_space<vmem>>, vector<1x1x128xf32>,
    return
  }
  func.func @transform_0(%arg0: i32) -> (i32, i32, i32) {
    %c0_i32 = arith.constant 0 : i32
    %c0_i32_0 = arith.constant 0 : i32
    %c0_i32_1 = arith.constant 0 : i32
    return %arg0, %c0_i32, %c0_i32_0 : i32, i32, i32
  }
  func.func @transform_1(%arg0: i32) -> (i32, i32) {
    %c0_i32 = arith.constant 0 : i32
    %c0_i32_0 = arith.constant 0 : i32
    %c0_i32_1 = arith.constant 0 : i32
    return %c0_i32, %c0_i32_0 : i32, i32
  }
  func.func @transform_2(%arg0: i32) -> (i32, i32) {
    %c0_i32 = arith.constant 0 : i32
    %c0_i32_0 = arith.constant 0 : i32
    %c0_i32_1 = arith.constant 0 : i32
    return %c0_i32, %c0_i32_0 : i32, i32
  }
  func.func @transform_3(%arg0: i32) -> (i32, i32, i32) {
    %c0_i32 = arith.constant 0 : i32
    %c0_i32_0 = arith.constant 0 : i32
    %c0_i32_1 = arith.constant 0 : i32
    %c0_i32_2 = arith.constant 0 : i32
    return %c0_i32, %c0_i32_0, %c0_i32_1 : i32, i32, i32
  }
  func.func @transform_4(%arg0: i32) -> (i32, i32, i32) {
    %c0_i32 = arith.constant 0 : i32
    %c0_i32_0 = arith.constant 0 : i32
    %c0_i32_1 = arith.constant 0 : i32
    return %arg0, %c0_i32, %c0_i32_0 : i32, i32, i32
  }
  func.func @transform_5(%arg0: i32) -> (i32, i32, i32) {
    %c0_i32 = arith.constant 0 : i32
    %c0_i32_0 = arith.constant 0 : i32
    %c0_i32_1 = arith.constant 0 : i32
    return %arg0, %c0_i32, %c0_i32_0 : i32, i32, i32
  }
}

module attributes {stable_mosaic.version = 11 : i64} {
  func.func @_bn_relu_residual_kernel(%arg0: i32, %arg1: memref<1x16x128xf32, #tpu.memory_space<vmem>>, %arg2: memref<1x16x128xbf16, #tpu.memory_space<vmem>>, %arg3: memref<1x128xf32, #tpu.memory_space<vmem>>, %arg4: memref<1x128xf32, #tpu.memory_space<vmem>>, %arg5: memref<1x16x128xf32, #tpu.memory_space<vmem>>) attributes {dimension_semantics = [#tpu.dimension_semantics<parallel>], iteration_bounds = array<i64: 2>, scalar_prefetch = 0 : i64, scratch_operands = 0 : i64, tpu.core_type = #tpu.core_type<tc>, window_params = [{transform_indices = @transform_0, window_bounds = array<i64: 1, 16, 128>}, {transform_indices = @transform_1, window_bounds = array<i64: 1, 16, 128>}, {pipeline_mode = #tpu.pipeline_mode<synchronous>, transform_indices = @transform_2, window_bounds = array<i64: 1, 128>}, {pipeline_mode = #tpu.pipeline_mode<synchronous>, transform_indices = @transform_3, window_bounds = array<i64: 1, 128>}, {transform_indices = @transform_4, window_bounds = array<i64: 1, 16, 128>}]} {
    %c0 = arith.constant 0 : index
    %c0_0 = arith.constant 0 : index
    %0 = vector.load %arg3[%c0, %c0_0] : memref<1x128xf32, #tpu.memory_space<vmem>>, vector<1x128xf32>
    %1 = vector.shape_cast %0 : vector<1x128xf32> to vector<1x1x128xf32>
    %c0_1 = arith.constant 0 : index
    %c0_2 = arith.constant 0 : index
    %2 = vector.load %arg4[%c0_1, %c0_2] : memref<1x128xf32, #tpu.memory_space<vmem>>, vector<1x128xf32>
    %3 = vector.shape_cast %2 : vector<1x128xf32> to vector<1x1x128xf32>
    %c0_3 = arith.constant 0 : index
    %c0_4 = arith.constant 0 : index
    %c0_5 = arith.constant 0 : index
    %4 = vector.load %arg2[%c0_3, %c0_4, %c0_5] : memref<1x16x128xbf16, #tpu.memory_space<vmem>>, vector<1x16x128xbf16>
    %5 = arith.extf %4 : vector<1x16x128xbf16> to vector<1x16x128xf32>
    %6 = vector.broadcast %1 : vector<1x1x128xf32> to vector<1x16x128xf32>
    %7 = arith.mulf %5, %6 : vector<1x16x128xf32>
    %8 = vector.broadcast %3 : vector<1x1x128xf32> to vector<1x16x128xf32>
    %9 = arith.addf %7, %8 : vector<1x16x128xf32>
    %cst = arith.constant 0.000000e+00 : f32
    %10 = vector.broadcast %cst : f32 to vector<1x16x128xf32>
    %11 = arith.maximumf %9, %10 : vector<1x16x128xf32>
    %c0_6 = arith.constant 0 : index
    %c0_7 = arith.constant 0 : index
    %c0_8 = arith.constant 0 : index
    %12 = vector.load %arg1[%c0_6, %c0_7, %c0_8] : memref<1x16x128xf32, #tpu.memory_space<vmem>>, vector<1x16x128xf32>
    %13 = arith.addf %12, %11 : vector<1x16x128xf32>
    %cst_9 = arith.constant 0.000000e+00 : f32
    %14 = vector.broadcast %cst_9 : f32 to vector<1x16x128xf32>
    %15 = arith.maximumf %13, %14 : vector<1x16x128xf32>
    %c0_10 = arith.constant 0 : index
    %c0_11 = arith.constant 0 : index
    %c0_12 = arith.constant 0 : index
    %16 = vector.load %arg5[%c0_10, %c0_11, %c0_12] : memref<1x16x128xf32, #tpu.memory_space<vmem>>, vector<1x16x128xf32>
    tpu.vector_store %arg5[%c0_10, %c0_11, %c0_12], %15 {strides = array<i32>} : memref<1x16x128xf32, #tpu.memory_space<vmem>>, vector<1x16x128xf32>,
    return
  }
  func.func @transform_0(%arg0: i32) -> (i32, i32, i32) {
    %c0_i32 = arith.constant 0 : i32
    %c0_i32_0 = arith.constant 0 : i32
    %c0_i32_1 = arith.constant 0 : i32
    return %arg0, %c0_i32, %c0_i32_0 : i32, i32, i32
  }
  func.func @transform_1(%arg0: i32) -> (i32, i32, i32) {
    %c0_i32 = arith.constant 0 : i32
    %c0_i32_0 = arith.constant 0 : i32
    %c0_i32_1 = arith.constant 0 : i32
    return %arg0, %c0_i32, %c0_i32_0 : i32, i32, i32
  }
  func.func @transform_2(%arg0: i32) -> (i32, i32) {
    %c0_i32 = arith.constant 0 : i32
    %c0_i32_0 = arith.constant 0 : i32
    %c0_i32_1 = arith.constant 0 : i32
    return %c0_i32, %c0_i32_0 : i32, i32
  }
  func.func @transform_3(%arg0: i32) -> (i32, i32) {
    %c0_i32 = arith.constant 0 : i32
    %c0_i32_0 = arith.constant 0 : i32
    %c0_i32_1 = arith.constant 0 : i32
    return %c0_i32, %c0_i32_0 : i32, i32
  }
  func.func @transform_4(%arg0: i32) -> (i32, i32, i32) {
    %c0_i32 = arith.constant 0 : i32
    %c0_i32_0 = arith.constant 0 : i32
    %c0_i32_1 = arith.constant 0 : i32
    return %arg0, %c0_i32, %c0_i32_0 : i32, i32, i32
  }
}

</mosaic_0001>

<llo_original>
// kernel: tile.23
$region0: #{tile.23}
  #allocation0 [shape = 's32[1]{0}', space=sflag, size = 0x4, scoped, tag = 'scoped memory for tile.23']
  %s0 = inlined_call_operand.vmem [shape: f32[8], index: 0, kind: input, shape index: {}]
  %s1 = inlined_call_operand.vmem [shape: f32[16,8], index: 1, kind: output, shape index: {}]
  // Predicated region
  $region2: #{tile.23} parent=0 // pred_check
    _
  $region3: #{tile.23} parent=0 // pred_check_branch
    %3 = sbr.rel (0) target = $region5
  $region4: #{tile.23} parent=0 // pred_region
    _
  $region5: #{tile.23} parent=0 // pred_fallthru
    _
  %v4 = vld [vmem:[%s0] ss:$0 sm:$0xff]
  %5 = vst [vmem:[%s1] sm:$0xff] %v4
  %s6 = scalar_lea.vmem %s1, 8
  %7 = vst [vmem:[%s6] sm:$0xff] %v4

// kernel: tile.24
$region0: #{tile.24}
  %s0 = inlined_call_operand.vmem [shape: f32[16,8], index: 0, kind: input, shape index: {}]
  %s1 = inlined_call_operand.vmem [shape: f32[1,128], index: 1, kind: output, shape index: {}]
  $region1: #{tile.24} parent=0
    #allocation0 [shape = 'u8[4096]{0}', space=vmem, size = 0x1000, scoped, tag = 'scoped mem for output reshape']
    %v2 = vld [vmem:[%s0] sm:$0x1]
    %vm3 = vcmask 64512
    %4 = vst.msk [vmem:[#allocation0] sm:$0x1] %vm3, %v2
    %s5 = scalar_lea.vmem %s0, 15
    %v6 = vld [vmem:[%s5] sm:$0x1]
    %7 = vrot.lane.b32.xlu0 %v6, 120
    %v8 = vpop.permute.xlu0 %7
    %vm9 = vcmask 1048512
    %10 = vst.msk [vmem:[#allocation0] sm:$0x1] %vm9, %v8
    %s11 = scalar_lea.vmem %s0, 14
    %v12 = vld [vmem:[%s11] sm:$0x1]
    %13 = vrot.lane.b32.xlu0 %v12, 112
    %v14 = vpop.permute.xlu0 %13
    %vm15 = vcmask 982912
    %16 = vst.msk [vmem:[#allocation0] sm:$0x1] %vm15, %v14
    %s17 = scalar_lea.vmem %s0, 13
    %v18 = vld [vmem:[%s17] sm:$0x1]
    %19 = vrot.lane.b32.xlu0 %v18, 104
    %v20 = vpop.permute.xlu0 %19
    %vm21 = vcmask 917312
    %22 = vst.msk [vmem:[#allocation0] sm:$0x1] %vm21, %v20
    %s23 = scalar_lea.vmem %s0, 12
    %v24 = vld [vmem:[%s23] sm:$0x1]
    %25 = vrot.lane.b32.xlu0 %v24, 96
    %v26 = vpop.permute.xlu0 %25
    %vm27 = vcmask 851712
    %28 = vst.msk [vmem:[#allocation0] sm:$0x1] %vm27, %v26
    %s29 = scalar_lea.vmem %s0, 11
    %v30 = vld [vmem:[%s29] sm:$0x1]
    %31 = vrot.lane.b32.xlu0 %v30, 88
    %v32 = vpop.permute.xlu0 %31
    %vm33 = vcmask 786112
    %34 = vst.msk [vmem:[#allocation0] sm:$0x1] %vm33, %v32
    %s35 = scalar_lea.vmem %s0, 10
    %v36 = vld [vmem:[%s35] sm:$0x1]
    %37 = vrot.lane.b32.xlu0 %v36, 80
    %v38 = vpop.permute.xlu0 %37
    %vm39 = vcmask 720512
    %40 = vst.msk [vmem:[#allocation0] sm:$0x1] %vm39, %v38
    %s41 = scalar_lea.vmem %s0, 9
    %v42 = vld [vmem:[%s41] sm:$0x1]
    %43 = vrot.lane.b32.xlu0 %v42, 72
    %v44 = vpop.permute.xlu0 %43
    %vm45 = vcmask 654912
    %46 = vst.msk [vmem:[#allocation0] sm:$0x1] %vm45, %v44
    %s47 = scalar_lea.vmem %s0, 8
    %v48 = vld [vmem:[%s47] sm:$0x1]
    %49 = vrot.lane.b32.xlu0 %v48, 64
    %v50 = vpop.permute.xlu0 %49
    %vm51 = vcmask 589312
    %52 = vst.msk [vmem:[#allocation0] sm:$0x1] %vm51, %v50
    %s53 = scalar_lea.vmem %s0, 7
    %v54 = vld [vmem:[%s53] sm:$0x1]
    %55 = vrot.lane.b32.xlu0 %v54, 56
    %v56 = vpop.permute.xlu0 %55
    %vm57 = vcmask 523712
    %58 = vst.msk [vmem:[#allocation0] sm:$0x1] %vm57, %v56
    %s59 = scalar_lea.vmem %s0, 6
    %v60 = vld [vmem:[%s59] sm:$0x1]
    %61 = vrot.lane.b32.xlu0 %v60, 48
    %v62 = vpop.permute.xlu0 %61
    %vm63 = vcmask 458112
    %64 = vst.msk [vmem:[#allocation0] sm:$0x1] %vm63, %v62
    %s65 = scalar_lea.vmem %s0, 5
    %v66 = vld [vmem:[%s65] sm:$0x1]
    %67 = vrot.lane.b32.xlu0 %v66, 40
    %v68 = vpop.permute.xlu0 %67
    %vm69 = vcmask 392512
    %70 = vst.msk [vmem:[#allocation0] sm:$0x1] %vm69, %v68
    %s71 = scalar_lea.vmem %s0, 4
    %v72 = vld [vmem:[%s71] sm:$0x1]
    %73 = vrot.lane.b32.xlu0 %v72, 32
    %v74 = vpop.permute.xlu0 %73
    %vm75 = vcmask 326912
    %76 = vst.msk [vmem:[#allocation0] sm:$0x1] %vm75, %v74
    %s77 = scalar_lea.vmem %s0, 3
    %v78 = vld [vmem:[%s77] sm:$0x1]
    %79 = vrot.lane.b32.xlu0 %v78, 24
    %v80 = vpop.permute.xlu0 %79
    %vm81 = vcmask 261312
    %82 = vst.msk [vmem:[#allocation0] sm:$0x1] %vm81, %v80
    %s83 = scalar_lea.vmem %s0, 2
    %v84 = vld [vmem:[%s83] sm:$0x1]
    %85 = vrot.lane.b32.xlu0 %v84, 16
    %v86 = vpop.permute.xlu0 %85
    %vm87 = vcmask 195712
    %88 = vst.msk [vmem:[#allocation0] sm:$0x1] %vm87, %v86
    %s89 = scalar_lea.vmem %s0, 1
    %v90 = vld [vmem:[%s89] sm:$0x1]
    %91 = vrot.lane.b32.xlu0 %v90, 8
    %v92 = vpop.permute.xlu0 %91
    %vm93 = vcmask 130112
    %94 = vst.msk [vmem:[#allocation0] sm:$0x1] %vm93, %v92
    %s96 = sshll.u32 1, 1
    %s97 = ssub.s32 %s96, 1
    %v99 = vld [vmem:[#allocation0] sm:%s97]
    %s100 = sshll.u32 1, 1
    %s101 = ssub.s32 %s100, 1
    %102 = vst [vmem:[%s1] sm:%s101] %v99

// kernel: residual_block_forward.3
$region0: #{residual_block_forward.3}
  #allocation0 [shape = 'u32[]', space=smem, size = 0x4, offset = 0x4, fixed_abs, tag = 'smem constant byte address 0x4 - core index']
  #allocation1 [shape = 'u32[144,128]{1,0:T(1,128)}', space=vmem, size = 0x12000, scoped, tag = 'internal scratch']
  #allocation2 [shape = 'f32[1,18,128]{2,1,0:T(8,128)}', space=vmem, size = 0x3000, scoped, tag = 'scratch operand']
  %s0 = inlined_call_operand.vmem [shape: f32[2,16,128], index: 0, kind: input, shape index: {}]
  %s1 = inlined_call_operand.vmem [shape: bf16[3,128,128], index: 1, kind: input, shape index: {}]
  %s2 = inlined_call_operand.vmem [shape: bf16[2,16,128], index: 2, kind: output, shape index: {0}]
  %s3 = inlined_call_operand.vmem [shape: f32[2,2,128], index: 3, kind: output, shape index: {1}]
  %4 = xla_tuple %s2, %s3
  %s5 = sld [smem:[#allocation0]]
  $region49: #{residual_block_forward.3} parent=0
    _
  %s7 = ssub.s32 1, %s5
  %s8 = scalar_select 0, %s7, %s5
  loop: start=0, step=1, limit=4
  $region2: #{residual_block_forward.3} parent=0 // loop_pre_header
    _
  $region3: #{residual_block_forward.3} parent=0 // loop_header
    %s10 = sphi 0, %s14
    %p11 = scmp.ge.s32.totalorder %s10, 4
    %s20 = sphi 0, %s22
    %s23 = sphi 0, %s20
    %s24 = sphi 0, %s23
    %s40 = sphi 0, %s24
    %s44 = sphi 0, %s44
    %s46 = sphi 0, %s44
    %s47 = sphi 0, %s46
    %s61 = sphi 0, %s47
    %s67 = sphi 0, %s69
    %s70 = sphi 0, %s67
    %s71 = sphi 0, %s70
    %s87 = sphi 0, %s71
    %s93 = sphi 0, %s95
    %s96 = sphi 0, %s93
    %s97 = sphi 0, %s96
    %s113 = sphi 0, %s97
  $region4: #{residual_block_forward.3} parent=0 // loop_header_branch
    %13 = sbr.rel (%p11) target = $region8
  $region5: #{residual_block_forward.3} parent=0 // loop_body
    %s15 = ssub.s32 %s10, 1
    %s16 = ssub.s32 %s10, 2
    %s17 = sadd.s32 %s10, 1
    %s18 = ssub.s32 %s10, %s17
    %p19 = scmp.eq.s32.totalorder %s18, 0
    %s21 = sadd.s32 %s20, 1
    %s22 = scalar_select %p19, %s20, %s21
    %p25 = pneg %p19
    %p26 = scmp.eq.s32.totalorder %s10, 1
    %p27 = por %p25, %p26
    %p28 = scmp.ne.s32.totalorder %s20, %s23
    %p29 = scmp.eq.s32.totalorder %s10, 0
    %p30 = por %p28, %p29
    %p31 = scmp.ne.s32.totalorder %s20, %s23
    %p32 = scmp.eq.s32.totalorder %s15, 1
    %p33 = por %p31, %p32
    %p34 = scmp.ne.s32.totalorder %s23, %s24
    %p35 = scmp.eq.s32.totalorder %s15, 0
    %p36 = por %p34, %p35
    %p37 = scmp.ne.s32.totalorder %s23, %s24
    %p38 = scmp.eq.s32.totalorder %s16, 1
    %p39 = por %p37, %p38
    %p41 = scmp.ne.s32.totalorder %s24, %s40
    %p42 = scmp.eq.s32.totalorder %s16, 0
    %p43 = por %p41, %p42
    %s45 = sadd.s32 %s44, 1
    %p48 = scmp.eq.s32.totalorder %s10, 1
    %p49 = scmp.ne.s32.totalorder %s44, %s46
    %p50 = scmp.eq.s32.totalorder %s10, 0
    %p51 = por %p49, %p50
    %p52 = scmp.ne.s32.totalorder %s44, %s46
    %p53 = scmp.eq.s32.totalorder %s15, 1
    %p54 = por %p52, %p53
    %p55 = scmp.ne.s32.totalorder %s46, %s47
    %p56 = scmp.eq.s32.totalorder %s15, 0
    %p57 = por %p55, %p56
    %p58 = scmp.ne.s32.totalorder %s46, %s47
    %p59 = scmp.eq.s32.totalorder %s16, 1
    %p60 = por %p58, %p59
    %p62 = scmp.ne.s32.totalorder %s47, %s61
    %p63 = scmp.eq.s32.totalorder %s16, 0
    %p64 = por %p62, %p63
    %s65 = ssub.s32 %s10, %s17
    %p66 = scmp.eq.s32.totalorder %s65, 0
    %s68 = sadd.s32 %s67, 1
    %s69 = scalar_select %p66, %s67, %s68
    %p72 = pneg %p66
    %p73 = scmp.eq.s32.totalorder %s10, 1
    %p74 = por %p72, %p73
    %p75 = scmp.ne.s32.totalorder %s67, %s70
    %p76 = scmp.eq.s32.totalorder %s10, 0
    %p77 = por %p75, %p76
    %p78 = scmp.ne.s32.totalorder %s67, %s70
    %p79 = scmp.eq.s32.totalorder %s15, 1
    %p80 = por %p78, %p79
    %p81 = scmp.ne.s32.totalorder %s70, %s71
    %p82 = scmp.eq.s32.totalorder %s15, 0
    %p83 = por %p81, %p82
    %p84 = scmp.ne.s32.totalorder %s70, %s71
    %p85 = scmp.eq.s32.totalorder %s16, 1
    %p86 = por %p84, %p85
    %p88 = scmp.ne.s32.totalorder %s71, %s87
    %p89 = scmp.eq.s32.totalorder %s16, 0
    %p90 = por %p88, %p89
    %s91 = ssub.s32 %s10, %s17
    %p92 = scmp.eq.s32.totalorder %s91, 0
    %s94 = sadd.s32 %s93, 1
    %s95 = scalar_select %p92, %s93, %s94
    %p98 = pneg %p92
    %p99 = scmp.eq.s32.totalorder %s10, 1
    %p100 = por %p98, %p99
    %p101 = scmp.ne.s32.totalorder %s93, %s96
    %p102 = scmp.eq.s32.totalorder %s10, 0
    %p103 = por %p101, %p102
    %p104 = scmp.ne.s32.totalorder %s93, %s96
    %p105 = scmp.eq.s32.totalorder %s15, 1
    %p106 = por %p104, %p105
    %p107 = scmp.ne.s32.totalorder %s96, %s97
    %p108 = scmp.eq.s32.totalorder %s15, 0
    %p109 = por %p107, %p108
    %p110 = scmp.ne.s32.totalorder %s96, %s97
    %p111 = scmp.eq.s32.totalorder %s16, 1
    %p112 = por %p110, %p111
    %p114 = scmp.ne.s32.totalorder %s97, %s113
    %p115 = scmp.eq.s32.totalorder %s16, 0
    %p116 = por %p114, %p115
    %p117 = scmp.le.s32.totalorder 1, %s10
    %p118 = scmp.lt.s32.totalorder %s10, 3
    %p119 = pnand %p117, %p118
    %p120 = pneg %p119
    // Predicated region
    $region9: #{residual_block_forward.3} parent=5 // pred_check
      _
    $region10: #{residual_block_forward.3} parent=5 // pred_check_branch
      %122 = sbr.rel (%p119) target = $region12
    $region11: #{residual_block_forward.3} parent=5 // pred_region
      %s123 = ssub.s32 %s10, 1
      // Predicated region
      $region13: #{residual_block_forward.3} parent=11 // pred_check
        %p124 = pneg %p57
      $region14: #{residual_block_forward.3} parent=11 // pred_check_branch
        %126 = sbr.rel (%p124) target = $region16
      $region15: #{residual_block_forward.3} parent=11 // pred_region
        _
      $region16: #{residual_block_forward.3} parent=11 // pred_fallthru
        _
    $region12: #{residual_block_forward.3} parent=5 // pred_fallthru
      _
    %p127 = scmp.lt.s32.totalorder %s10, 2
    // Predicated region
    $region17: #{residual_block_forward.3} parent=5 // pred_check
      %p128 = pneg %p127
    $region18: #{residual_block_forward.3} parent=5 // pred_check_branch
      %130 = sbr.rel (%p128) target = $region20
    $region19: #{residual_block_forward.3} parent=5 // pred_region
      // Predicated region
      $region21: #{residual_block_forward.3} parent=19 // pred_check
        %p131 = pneg %p30
      $region22: #{residual_block_forward.3} parent=19 // pred_check_branch
        %133 = sbr.rel (%p131) target = $region24
      $region23: #{residual_block_forward.3} parent=19 // pred_region
        %p134 = scmp.lt.s32.totalorder %s10, 1
        %s135 = scalar_select %p134, %s10, 1
        %s136 = smul.addr %s135, 2
        %s137 = smul.addr %s136, 8
        %s138 = scalar_lea.vmem %s0, %s137
      $region24: #{residual_block_forward.3} parent=19 // pred_fallthru
        _
    $region20: #{residual_block_forward.3} parent=5 // pred_fallthru
      _
    %p139 = scmp.le.s32.totalorder 1, %s10
    %p140 = scmp.lt.s32.totalorder %s10, 3
    %p141 = pnand %p139, %p140
    %p142 = pneg %p141
    // Predicated region
    $region25: #{residual_block_forward.3} parent=5 // pred_check
      _
    $region26: #{residual_block_forward.3} parent=5 // pred_check_branch
      %144 = sbr.rel (%p141) target = $region28
    $region27: #{residual_block_forward.3} parent=5 // pred_region
      %s145 = ssub.s32 %s10, 1
      %p146 = scmp.lt.s32.totalorder %s15, 1
      %s147 = scalar_select %p146, %s15, 1
      %s148 = smul.addr %s147, 2
      %s149 = smul.addr %s148, 8
      %s150 = scalar_lea.vmem %s0, %s149
      %p151 = pneg %p36
      %p152 = pneg %p33
      %p153 = pneg %p57
      %p154 = pneg %p54
      %p155 = pneg %p83
      %p156 = pneg %p80
      %p157 = scmp.lt.s32.totalorder %s15, 1
      %s158 = scalar_select %p157, %s15, 1
      %s159 = smul.addr %s158, 2
      %s160 = smul.addr %s159, 4
      %s161 = scalar_lea.vmem %s2, %s160
      %p162 = pneg %p109
      %p163 = pneg %p106
      %p164 = scmp.lt.s32.totalorder %s15, 1
      %s165 = scalar_select %p164, %s15, 1
      %s166 = smul.addr %s165, 2
      %s167 = scalar_lea.vmem %s3, %s166
      %p168 = scmp.lt.s32.totalorder %s15, 1
      %s169 = scalar_select %p168, %s15, 1
      %s170 = smul.addr %s169, 2
      %s171 = smul.addr %s170, 8
      %s172 = scalar_lea.vmem %s0, %s171
      %p173 = scmp.lt.s32.totalorder %s15, 1
      %s174 = scalar_select %p173, %s15, 1
      %s175 = smul.addr %s174, 2
      %s176 = smul.addr %s175, 4
      %s177 = scalar_lea.vmem %s2, %s176
      %p178 = scmp.lt.s32.totalorder %s15, 1
      %s179 = scalar_select %p178, %s15, 1
      %s180 = smul.addr %s179, 2
      %s181 = scalar_lea.vmem %s3, %s180
      %v183 = vld [vmem:[%s172] sm:$0xff]
      %v184 = vld [vmem:[%s172 + $0x8] sm:$0xff]
      %185 = vst [vmem:[#allocation2] sm:$0x1] 0.0
      %186 = vst [vmem:[#allocation2 + $0x11] sm:$0x1] 0.0
      %187 = vst [vmem:[#allocation2 + $0x1] sm:$0xff] %v183
      %188 = vst [vmem:[#allocation2 + $0x9] sm:$0xff] %v184
      %v189 = vld [vmem:[#allocation2] sm:$0xff]
      %v190 = vld [vmem:[#allocation2 + $0x8] sm:$0xff]
      %v191 = vpack.c.bf16 %v190, %v189
      %v192 = vld [vmem:[%s1] sm:$0xf]
      %v193 = vld [vmem:[%s1 + $0x4] sm:$0xf]
      %v194 = vld [vmem:[%s1 + $0x8] sm:$0xf]
      %v195 = vld [vmem:[%s1 + $0xc] sm:$0xf]
      %v196 = vld [vmem:[%s1 + $0x10] sm:$0xf]
      %v197 = vld [vmem:[%s1 + $0x14] sm:$0xf]
      %v198 = vld [vmem:[%s1 + $0x18] sm:$0xf]
      %v199 = vld [vmem:[%s1 + $0x1c] sm:$0xf]
      %v200 = vld [vmem:[%s1 + $0x20] sm:$0xf]
      %v201 = vld [vmem:[%s1 + $0x24] sm:$0xf]
      %v202 = vld [vmem:[%s1 + $0x28] sm:$0xf]
      %v203 = vld [vmem:[%s1 + $0x2c] sm:$0xf]
      %v204 = vld [vmem:[%s1 + $0x30] sm:$0xf]
      %v205 = vld [vmem:[%s1 + $0x34] sm:$0xf]
      %v206 = vld [vmem:[%s1 + $0x38] sm:$0xf]
      %v207 = vld [vmem:[%s1 + $0x3c] sm:$0xf]
      %v208 = vld [vmem:[#allocation2 + $0x1] sm:$0xff]
      %v209 = vld [vmem:[#allocation2 + $0x9] sm:$0xff]
      %v210 = vpack.c.bf16 %v209, %v208
      %s211 = scalar_lea.vmem %s1, 64
      %v212 = vld [vmem:[%s211] sm:$0xf]
      %v213 = vld [vmem:[%s211 + $0x4] sm:$0xf]
      %v214 = vld [vmem:[%s211 + $0x8] sm:$0xf]
      %v215 = vld [vmem:[%s211 + $0xc] sm:$0xf]
      %v216 = vld [vmem:[%s211 + $0x10] sm:$0xf]
      %v217 = vld [vmem:[%s211 + $0x14] sm:$0xf]
      %v218 = vld [vmem:[%s211 + $0x18] sm:$0xf]
      %v219 = vld [vmem:[%s211 + $0x1c] sm:$0xf]
      %v220 = vld [vmem:[%s211 + $0x20] sm:$0xf]
      %v221 = vld [vmem:[%s211 + $0x24] sm:$0xf]
      %v222 = vld [vmem:[%s211 + $0x28] sm:$0xf]
      %v223 = vld [vmem:[%s211 + $0x2c] sm:$0xf]
      %v224 = vld [vmem:[%s211 + $0x30] sm:$0xf]
      %v225 = vld [vmem:[%s211 + $0x34] sm:$0xf]
      %v226 = vld [vmem:[%s211 + $0x38] sm:$0xf]
      %v227 = vld [vmem:[%s211 + $0x3c] sm:$0xf]
      %v244 = vunpack.c.l.b16 %v212
      %v245 = vunpack.c.l.b16 %v213
      %v246 = vunpack.c.l.b16 %v214
      %v247 = vunpack.c.l.b16 %v215
      %v248 = vunpack.c.l.b16 %v216
      %v249 = vunpack.c.l.b16 %v217
      %v250 = vunpack.c.l.b16 %v218
      %v251 = vunpack.c.l.b16 %v219
      %v252 = vunpack.c.l.b16 %v220
      %v253 = vunpack.c.l.b16 %v221
      %v254 = vunpack.c.l.b16 %v222
      %v255 = vunpack.c.l.b16 %v223
      %v256 = vunpack.c.l.b16 %v224
      %v257 = vunpack.c.l.b16 %v225
      %v258 = vunpack.c.l.b16 %v226
      %v259 = vunpack.c.l.b16 %v227
      %v260 = vpack.c.b16 %v245, %v244
      %v261 = vpack.c.b16 %v247, %v246
      %v262 = vpack.c.b16 %v249, %v248
      %v263 = vpack.c.b16 %v251, %v250
      %v264 = vpack.c.b16 %v253, %v252
      %v265 = vpack.c.b16 %v255, %v254
      %v266 = vpack.c.b16 %v257, %v256
      %v267 = vpack.c.b16 %v259, %v258
      %276 = vmatprep.subr.bf16.mxu0 0
      %277 = vmatpush1.bf16.msra.mxu0 %v267
      %278 = vmatprep.subr.bf16.mxu0 0
      %279 = vmatpush1.bf16.msra.mxu0 %v266
      %280 = vmatprep.subr.bf16.mxu0 0
      %281 = vmatpush1.bf16.msra.mxu0 %v265
      %282 = vmatprep.subr.bf16.mxu0 0
      %283 = vmatpush1.bf16.msra.mxu0 %v264
      %284 = vmatprep.subr.bf16.mxu0 0
      %285 = vmatpush1.bf16.msra.mxu0 %v263
      %286 = vmatprep.subr.bf16.mxu0 0
      %287 = vmatpush1.bf16.msra.mxu0 %v262
      %288 = vmatprep.subr.bf16.mxu0 0
      %289 = vmatpush1.bf16.msra.mxu0 %v261
      %290 = vmatprep.subr.bf16.mxu0 0
      %291 = vmatpush1.bf16.msra.mxu0 %v260
      %292 = vmatprep.subr.bf16.mxu0 0
      %293 = vmatpush2.bf16.msra.mxu0 0
      %294 = vmatprep.subr.bf16.mxu0 0
      %295 = vmatpush2.bf16.msra.mxu0 0
      %296 = vmatprep.subr.bf16.mxu0 0
      %297 = vmatpush2.bf16.msra.mxu0 0
      %298 = vmatprep.subr.bf16.mxu0 0
      %299 = vmatpush2.bf16.msra.mxu0 0
      %300 = vmatprep.subr.bf16.mxu0 0
      %301 = vmatpush2.bf16.msra.mxu0 0
      %302 = vmatprep.subr.bf16.mxu0 0
      %303 = vmatpush2.bf16.msra.mxu0 0
      %304 = vmatprep.subr.bf16.mxu0 0
      %305 = vmatpush2.bf16.msra.mxu0 0
      %306 = vmatprep.subr.bf16.mxu0 0
      %307 = vmatpush2.bf16.msra.mxu0 0
      %308 = vmatprep.mubr.bf16.mxu0 0
      %309 = vmatmul.mubr.bf16.gmra.mxu0 %v210
      %v310 = vpop.f32.mrf.mxu0
      %v311 = vadd.f32 0.0, %v310
      %v312 = vpop.f32.mrf.mxu0
      %v313 = vpop.f32.mrf.mxu0
      %v314 = vadd.f32 0.0, %v313
      %v315 = vpop.f32.mrf.mxu0
      %316 = vdwg.mxu0
      %v333 = vunpack.c.l.b16 %v192
      %v334 = vunpack.c.l.b16 %v193
      %v335 = vunpack.c.l.b16 %v194
      %v336 = vunpack.c.l.b16 %v195
      %v337 = vunpack.c.l.b16 %v196
      %v338 = vunpack.c.l.b16 %v197
      %v339 = vunpack.c.l.b16 %v198
      %v340 = vunpack.c.l.b16 %v199
      %v341 = vunpack.c.l.b16 %v200
      %v342 = vunpack.c.l.b16 %v201
      %v343 = vunpack.c.l.b16 %v202
      %v344 = vunpack.c.l.b16 %v203
      %v345 = vunpack.c.l.b16 %v204
      %v346 = vunpack.c.l.b16 %v205
      %v347 = vunpack.c.l.b16 %v206
      %v348 = vunpack.c.l.b16 %v207
      %v349 = vpack.c.b16 %v334, %v333
      %v350 = vpack.c.b16 %v336, %v335
      %v351 = vpack.c.b16 %v338, %v337
      %v352 = vpack.c.b16 %v340, %v339
      %v353 = vpack.c.b16 %v342, %v341
      %v354 = vpack.c.b16 %v344, %v343
      %v355 = vpack.c.b16 %v346, %v345
      %v356 = vpack.c.b16 %v348, %v347
      %365 = vmatprep.subr.bf16.mxu0 0
      %366 = vmatpush1.bf16.msra.mxu0 %v356
      %367 = vmatprep.subr.bf16.mxu0 0
      %368 = vmatpush1.bf16.msra.mxu0 %v355
      %369 = vmatprep.subr.bf16.mxu0 0
      %370 = vmatpush1.bf16.msra.mxu0 %v354
      %371 = vmatprep.subr.bf16.mxu0 0
      %372 = vmatpush1.bf16.msra.mxu0 %v353
      %373 = vmatprep.subr.bf16.mxu0 0
      %374 = vmatpush1.bf16.msra.mxu0 %v352
      %375 = vmatprep.subr.bf16.mxu0 0
      %376 = vmatpush1.bf16.msra.mxu0 %v351
      %377 = vmatprep.subr.bf16.mxu0 0
      %378 = vmatpush1.bf16.msra.mxu0 %v350
      %379 = vmatprep.subr.bf16.mxu0 0
      %380 = vmatpush1.bf16.msra.mxu0 %v349
      %381 = vmatprep.subr.bf16.mxu0 0
      %382 = vmatpush2.bf16.msra.mxu0 0
      %383 = vmatprep.subr.bf16.mxu0 0
      %384 = vmatpush2.bf16.msra.mxu0 0
      %385 = vmatprep.subr.bf16.mxu0 0
      %386 = vmatpush2.bf16.msra.mxu0 0
      %387 = vmatprep.subr.bf16.mxu0 0
      %388 = vmatpush2.bf16.msra.mxu0 0
      %389 = vmatprep.subr.bf16.mxu0 0
      %390 = vmatpush2.bf16.msra.mxu0 0
      %391 = vmatprep.subr.bf16.mxu0 0
      %392 = vmatpush2.bf16.msra.mxu0 0
      %393 = vmatprep.subr.bf16.mxu0 0
      %394 = vmatpush2.bf16.msra.mxu0 0
      %395 = vmatprep.subr.bf16.mxu0 0
      %396 = vmatpush2.bf16.msra.mxu0 0
      %397 = vmatprep.mubr.bf16.mxu0 0
      %398 = vmatmul.mubr.bf16.gmra.mxu0 %v191
      %v399 = vpop.f32.mrf.mxu0
      %v400 = vadd.f32 %v311, %v399
      %v401 = vpop.f32.mrf.mxu0
      %v402 = vpop.f32.mrf.mxu0
      %v403 = vadd.f32 %v314, %v402
      %v404 = vpop.f32.mrf.mxu0
      %405 = vdwg.mxu0
      %v406 = vld [vmem:[#allocation2 + $0x2] sm:$0xff]
      %v407 = vld [vmem:[#allocation2 + $0xa] sm:$0xff]
      %v408 = vpack.c.bf16 %v407, %v406
      %s409 = scalar_lea.vmem %s1, 128
      %v410 = vld [vmem:[%s409] sm:$0xf]
      %v411 = vld [vmem:[%s409 + $0x4] sm:$0xf]
      %v412 = vld [vmem:[%s409 + $0x8] sm:$0xf]
      %v413 = vld [vmem:[%s409 + $0xc] sm:$0xf]
      %v414 = vld [vmem:[%s409 + $0x10] sm:$0xf]
      %v415 = vld [vmem:[%s409 + $0x14] sm:$0xf]
      %v416 = vld [vmem:[%s409 + $0x18] sm:$0xf]
      %v417 = vld [vmem:[%s409 + $0x1c] sm:$0xf]
      %v418 = vld [vmem:[%s409 + $0x20] sm:$0xf]
      %v419 = vld [vmem:[%s409 + $0x24] sm:$0xf]
      %v420 = vld [vmem:[%s409 + $0x28] sm:$0xf]
      %v421 = vld [vmem:[%s409 + $0x2c] sm:$0xf]
      %v422 = vld [vmem:[%s409 + $0x30] sm:$0xf]
      %v423 = vld [vmem:[%s409 + $0x34] sm:$0xf]
      %v424 = vld [vmem:[%s409 + $0x38] sm:$0xf]
      %v425 = vld [vmem:[%s409 + $0x3c] sm:$0xf]
      %v442 = vunpack.c.l.b16 %v410
      %v443 = vunpack.c.l.b16 %v411
      %v444 = vunpack.c.l.b16 %v412
      %v445 = vunpack.c.l.b16 %v413
      %v446 = vunpack.c.l.b16 %v414
      %v447 = vunpack.c.l.b16 %v415
      %v448 = vunpack.c.l.b16 %v416
      %v449 = vunpack.c.l.b16 %v417
      %v450 = vunpack.c.l.b16 %v418
      %v451 = vunpack.c.l.b16 %v419
      %v452 = vunpack.c.l.b16 %v420
      %v453 = vunpack.c.l.b16 %v421
      %v454 = vunpack.c.l.b16 %v422
      %v455 = vunpack.c.l.b16 %v423
      %v456 = vunpack.c.l.b16 %v424
      %v457 = vunpack.c.l.b16 %v425
      %v458 = vpack.c.b16 %v443, %v442
      %v459 = vpack.c.b16 %v445, %v444
      %v460 = vpack.c.b16 %v447, %v446
      %v461 = vpack.c.b16 %v449, %v448
      %v462 = vpack.c.b16 %v451, %v450
      %v463 = vpack.c.b16 %v453, %v452
      %v464 = vpack.c.b16 %v455, %v454
      %v465 = vpack.c.b16 %v457, %v456
      %474 = vmatprep.subr.bf16.mxu0 0
      %475 = vmatpush1.bf16.msra.mxu0 %v465
      %476 = vmatprep.subr.bf16.mxu0 0
      %477 = vmatpush1.bf16.msra.mxu0 %v464
      %478 = vmatprep.subr.bf16.mxu0 0
      %479 = vmatpush1.bf16.msra.mxu0 %v463
      %480 = vmatprep.subr.bf16.mxu0 0
      %481 = vmatpush1.bf16.msra.mxu0 %v462
      %482 = vmatprep.subr.bf16.mxu0 0
      %483 = vmatpush1.bf16.msra.mxu0 %v461
      %484 = vmatprep.subr.bf16.mxu0 0
      %485 = vmatpush1.bf16.msra.mxu0 %v460
      %486 = vmatprep.subr.bf16.mxu0 0
      %487 = vmatpush1.bf16.msra.mxu0 %v459
      %488 = vmatprep.subr.bf16.mxu0 0
      %489 = vmatpush1.bf16.msra.mxu0 %v458
      %490 = vmatprep.subr.bf16.mxu0 0
      %491 = vmatpush2.bf16.msra.mxu0 0
      %492 = vmatprep.subr.bf16.mxu0 0
      %493 = vmatpush2.bf16.msra.mxu0 0
      %494 = vmatprep.subr.bf16.mxu0 0
      %495 = vmatpush2.bf16.msra.mxu0 0
      %496 = vmatprep.subr.bf16.mxu0 0
      %497 = vmatpush2.bf16.msra.mxu0 0
      %498 = vmatprep.subr.bf16.mxu0 0
      %499 = vmatpush2.bf16.msra.mxu0 0
      %500 = vmatprep.subr.bf16.mxu0 0
      %501 = vmatpush2.bf16.msra.mxu0 0
      %502 = vmatprep.subr.bf16.mxu0 0
      %503 = vmatpush2.bf16.msra.mxu0 0
      %504 = vmatprep.subr.bf16.mxu0 0
      %505 = vmatpush2.bf16.msra.mxu0 0
      %506 = vmatprep.mubr.bf16.mxu0 0
      %507 = vmatmul.mubr.bf16.gmra.mxu0 %v408
      %v508 = vpop.f32.mrf.mxu0
      %v509 = vadd.f32 0.0, %v508
      %v510 = vpop.f32.mrf.mxu0
      %v511 = vpop.f32.mrf.mxu0
      %v512 = vadd.f32 0.0, %v511
      %v513 = vpop.f32.mrf.mxu0
      %514 = vdwg.mxu0
      %v515 = vadd.f32 %v400, %v509
      %v516 = vadd.f32 %v403, %v512
      %v517 = vpack.c.bf16 %v516, %v515
      %v519 = vunpack.c.l.b16 %v517
      %v520 = vunpack.c.h.b16 %v517
      %v521 = vpack.c.b16 %v519, %v519
      %v522 = vpack.c.b16 %v520, %v520
      %525 = vst [vmem:[%s177] sm:$0xf] %v521
      %526 = vst [vmem:[%s177 + $0x4] sm:$0xf] %v522
      %v527 = vadd.f32 %v515, %v516
      %v528 = vrot.slane %v527, 4
      %v529 = vadd.f32 %v527, %v528
      %v530 = vrot.slane %v529, 2
      %v531 = vadd.f32 %v529, %v530
      %v532 = vrot.slane %v531, 1
      %v533 = vadd.f32 %v531, %v532
      %534 = vst [vmem:[%s181] sm:$0x1] %v533
      %v535 = vmul.f32 %v515, %v515
      %v536 = vmul.f32 %v516, %v516
      %v537 = vadd.f32 %v535, %v536
      %v538 = vrot.slane %v537, 4
      %v539 = vadd.f32 %v537, %v538
      %v540 = vrot.slane %v539, 2
      %v541 = vadd.f32 %v539, %v540
      %v542 = vrot.slane %v541, 1
      %v543 = vadd.f32 %v541, %v542
      %544 = vst [vmem:[%s181 + $0x1] sm:$0x1] %v543
      %p545 = scmp.lt.s32.totalorder %s15, 1
      %s546 = scalar_select %p545, %s15, 1
      %s547 = smul.addr %s546, 2
      %s548 = smul.addr %s547, 4
      %s549 = scalar_lea.vmem %s2, %s548
      %p550 = scmp.lt.s32.totalorder %s15, 1
      %s551 = scalar_select %p550, %s15, 1
      %s552 = smul.addr %s551, 2
      %s553 = scalar_lea.vmem %s3, %s552
      // Predicated region
      $region29: #{residual_block_forward.3} parent=27 // pred_check
        %p554 = pneg %p80
      $region30: #{residual_block_forward.3} parent=27 // pred_check_branch
        %556 = sbr.rel (%p554) target = $region32
      $region31: #{residual_block_forward.3} parent=27 // pred_region
        _
      $region32: #{residual_block_forward.3} parent=27 // pred_fallthru
        _
      // Predicated region
      $region33: #{residual_block_forward.3} parent=27 // pred_check
        %p557 = pneg %p106
      $region34: #{residual_block_forward.3} parent=27 // pred_check_branch
        %559 = sbr.rel (%p557) target = $region36
      $region35: #{residual_block_forward.3} parent=27 // pred_region
        _
      $region36: #{residual_block_forward.3} parent=27 // pred_fallthru
        _
    $region28: #{residual_block_forward.3} parent=5 // pred_fallthru
      _
    %p560 = scmp.le.s32.totalorder 2, %s10
    // Predicated region
    $region37: #{residual_block_forward.3} parent=5 // pred_check
      %p561 = pneg %p560
    $region38: #{residual_block_forward.3} parent=5 // pred_check_branch
      %563 = sbr.rel (%p561) target = $region40
    $region39: #{residual_block_forward.3} parent=5 // pred_region
      %s564 = ssub.s32 %s10, 2
      // Predicated region
      $region41: #{residual_block_forward.3} parent=39 // pred_check
        %p565 = pneg %p86
      $region42: #{residual_block_forward.3} parent=39 // pred_check_branch
        %567 = sbr.rel (%p565) target = $region44
      $region43: #{residual_block_forward.3} parent=39 // pred_region
        %p568 = scmp.lt.s32.totalorder %s16, 1
        %s569 = scalar_select %p568, %s16, 1
        %s570 = smul.addr %s569, 2
        %s571 = smul.addr %s570, 4
        %s572 = scalar_lea.vmem %s2, %s571
      $region44: #{residual_block_forward.3} parent=39 // pred_fallthru
        _
      // Predicated region
      $region45: #{residual_block_forward.3} parent=39 // pred_check
        %p573 = pneg %p112
      $region46: #{residual_block_forward.3} parent=39 // pred_check_branch
        %575 = sbr.rel (%p573) target = $region48
      $region47: #{residual_block_forward.3} parent=39 // pred_region
        %p576 = scmp.lt.s32.totalorder %s16, 1
        %s577 = scalar_select %p576, %s16, 1
        %s578 = smul.addr %s577, 2
        %s579 = scalar_lea.vmem %s3, %s578
      $region48: #{residual_block_forward.3} parent=39 // pred_fallthru
        _
    $region40: #{residual_block_forward.3} parent=5 // pred_fallthru
      _
  $region6: #{residual_block_forward.3} parent=0 // loop_footer
    %s14 = sadd.s32 1, %s10
  $region7: #{residual_block_forward.3} parent=0 // loop_footer_branch
    %9 = sbr.rel target = $region3
  $region8: #{residual_block_forward.3} parent=0 // loop_exit
    _

// kernel: residual_block_forward.5
$region0: #{residual_block_forward.5}
  #allocation0 [shape = 'u32[]', space=smem, size = 0x4, offset = 0x4, fixed_abs, tag = 'smem constant byte address 0x4 - core index']
  #allocation1 [shape = 'u32[144,128]{1,0:T(1,128)}', space=vmem, size = 0x12000, scoped, tag = 'internal scratch']
  %s0 = inlined_call_operand.vmem [shape: f32[2,16,128], index: 0, kind: input, shape index: {}, may-alias: {0,4}]
  %s1 = inlined_call_operand.vmem [shape: bf16[2,16,128], index: 1, kind: input, shape index: {}]
  %s2 = inlined_call_operand.vmem [shape: f32[1,128], index: 2, kind: input, shape index: {}]
  %s3 = inlined_call_operand.vmem [shape: f32[1,128], index: 3, kind: input, shape index: {}]
  %s4 = inlined_call_operand.vmem [shape: f32[2,16,128], index: 4, kind: output, shape index: {}, may-alias: {0,4}]
  %s5 = sld [smem:[#allocation0]]
  $region49: #{residual_block_forward.5} parent=0
    _
  %s7 = ssub.s32 1, %s5
  %s8 = scalar_select 0, %s7, %s5
  loop: start=0, step=1, limit=4
  $region2: #{residual_block_forward.5} parent=0 // loop_pre_header
    _
  $region3: #{residual_block_forward.5} parent=0 // loop_header
    %s10 = sphi 0, %s14
    %p11 = scmp.ge.s32.totalorder %s10, 4
    %s20 = sphi 0, %s22
    %s23 = sphi 0, %s20
    %s24 = sphi 0, %s23
    %s40 = sphi 0, %s24
    %s46 = sphi 0, %s48
    %s49 = sphi 0, %s46
    %s50 = sphi 0, %s49
    %s66 = sphi 0, %s50
    %s70 = sphi 0, %s70
    %s72 = sphi 0, %s70
    %s73 = sphi 0, %s72
    %s87 = sphi 0, %s73
    %s91 = sphi 0, %s91
    %s93 = sphi 0, %s91
    %s94 = sphi 0, %s93
    %s108 = sphi 0, %s94
    %s114 = sphi 0, %s116
    %s117 = sphi 0, %s114
    %s118 = sphi 0, %s117
    %s134 = sphi 0, %s118
  $region4: #{residual_block_forward.5} parent=0 // loop_header_branch
    %13 = sbr.rel (%p11) target = $region8
  $region5: #{residual_block_forward.5} parent=0 // loop_body
    %s15 = ssub.s32 %s10, 1
    %s16 = ssub.s32 %s10, 2
    %s17 = sadd.s32 %s10, 1
    %s18 = ssub.s32 %s10, %s17
    %p19 = scmp.eq.s32.totalorder %s18, 0
    %s21 = sadd.s32 %s20, 1
    %s22 = scalar_select %p19, %s20, %s21
    %p25 = pneg %p19
    %p26 = scmp.eq.s32.totalorder %s10, 1
    %p27 = por %p25, %p26
    %p28 = scmp.ne.s32.totalorder %s20, %s23
    %p29 = scmp.eq.s32.totalorder %s10, 0
    %p30 = por %p28, %p29
    %p31 = scmp.ne.s32.totalorder %s20, %s23
    %p32 = scmp.eq.s32.totalorder %s15, 1
    %p33 = por %p31, %p32
    %p34 = scmp.ne.s32.totalorder %s23, %s24
    %p35 = scmp.eq.s32.totalorder %s15, 0
    %p36 = por %p34, %p35
    %p37 = scmp.ne.s32.totalorder %s23, %s24
    %p38 = scmp.eq.s32.totalorder %s16, 1
    %p39 = por %p37, %p38
    %p41 = scmp.ne.s32.totalorder %s24, %s40
    %p42 = scmp.eq.s32.totalorder %s16, 0
    %p43 = por %p41, %p42
    %s44 = ssub.s32 %s10, %s17
    %p45 = scmp.eq.s32.totalorder %s44, 0
    %s47 = sadd.s32 %s46, 1
    %s48 = scalar_select %p45, %s46, %s47
    %p51 = pneg %p45
    %p52 = scmp.eq.s32.totalorder %s10, 1
    %p53 = por %p51, %p52
    %p54 = scmp.ne.s32.totalorder %s46, %s49
    %p55 = scmp.eq.s32.totalorder %s10, 0
    %p56 = por %p54, %p55
    %p57 = scmp.ne.s32.totalorder %s46, %s49
    %p58 = scmp.eq.s32.totalorder %s15, 1
    %p59 = por %p57, %p58
    %p60 = scmp.ne.s32.totalorder %s49, %s50
    %p61 = scmp.eq.s32.totalorder %s15, 0
    %p62 = por %p60, %p61
    %p63 = scmp.ne.s32.totalorder %s49, %s50
    %p64 = scmp.eq.s32.totalorder %s16, 1
    %p65 = por %p63, %p64
    %p67 = scmp.ne.s32.totalorder %s50, %s66
    %p68 = scmp.eq.s32.totalorder %s16, 0
    %p69 = por %p67, %p68
    %s71 = sadd.s32 %s70, 1
    %p74 = scmp.eq.s32.totalorder %s10, 1
    %p75 = scmp.ne.s32.totalorder %s70, %s72
    %p76 = scmp.eq.s32.totalorder %s10, 0
    %p77 = por %p75, %p76
    %p78 = scmp.ne.s32.totalorder %s70, %s72
    %p79 = scmp.eq.s32.totalorder %s15, 1
    %p80 = por %p78, %p79
    %p81 = scmp.ne.s32.totalorder %s72, %s73
    %p82 = scmp.eq.s32.totalorder %s15, 0
    %p83 = por %p81, %p82
    %p84 = scmp.ne.s32.totalorder %s72, %s73
    %p85 = scmp.eq.s32.totalorder %s16, 1
    %p86 = por %p84, %p85
    %p88 = scmp.ne.s32.totalorder %s73, %s87
    %p89 = scmp.eq.s32.totalorder %s16, 0
    %p90 = por %p88, %p89
    %s92 = sadd.s32 %s91, 1
    %p95 = scmp.eq.s32.totalorder %s10, 1
    %p96 = scmp.ne.s32.totalorder %s91, %s93
    %p97 = scmp.eq.s32.totalorder %s10, 0
    %p98 = por %p96, %p97
    %p99 = scmp.ne.s32.totalorder %s91, %s93
    %p100 = scmp.eq.s32.totalorder %s15, 1
    %p101 = por %p99, %p100
    %p102 = scmp.ne.s32.totalorder %s93, %s94
    %p103 = scmp.eq.s32.totalorder %s15, 0
    %p104 = por %p102, %p103
    %p105 = scmp.ne.s32.totalorder %s93, %s94
    %p106 = scmp.eq.s32.totalorder %s16, 1
    %p107 = por %p105, %p106
    %p109 = scmp.ne.s32.totalorder %s94, %s108
    %p110 = scmp.eq.s32.totalorder %s16, 0
    %p111 = por %p109, %p110
    %s112 = ssub.s32 %s10, %s17
    %p113 = scmp.eq.s32.totalorder %s112, 0
    %s115 = sadd.s32 %s114, 1
    %s116 = scalar_select %p113, %s114, %s115
    %p119 = pneg %p113
    %p120 = scmp.eq.s32.totalorder %s10, 1
    %p121 = por %p119, %p120
    %p122 = scmp.ne.s32.totalorder %s114, %s117
    %p123 = scmp.eq.s32.totalorder %s10, 0
    %p124 = por %p122, %p123
    %p125 = scmp.ne.s32.totalorder %s114, %s117
    %p126 = scmp.eq.s32.totalorder %s15, 1
    %p127 = por %p125, %p126
    %p128 = scmp.ne.s32.totalorder %s117, %s118
    %p129 = scmp.eq.s32.totalorder %s15, 0
    %p130 = por %p128, %p129
    %p131 = scmp.ne.s32.totalorder %s117, %s118
    %p132 = scmp.eq.s32.totalorder %s16, 1
    %p133 = por %p131, %p132
    %p135 = scmp.ne.s32.totalorder %s118, %s134
    %p136 = scmp.eq.s32.totalorder %s16, 0
    %p137 = por %p135, %p136
    %p138 = scmp.le.s32.totalorder 1, %s10
    %p139 = scmp.lt.s32.totalorder %s10, 3
    %p140 = pnand %p138, %p139
    %p141 = pneg %p140
    // Predicated region
    $region9: #{residual_block_forward.5} parent=5 // pred_check
      _
    $region10: #{residual_block_forward.5} parent=5 // pred_check_branch
      %143 = sbr.rel (%p140) target = $region12
    $region11: #{residual_block_forward.5} parent=5 // pred_region
      %s144 = ssub.s32 %s10, 1
      // Predicated region
      $region13: #{residual_block_forward.5} parent=11 // pred_check
        %p145 = pneg %p83
      $region14: #{residual_block_forward.5} parent=11 // pred_check_branch
        %147 = sbr.rel (%p145) target = $region16
      $region15: #{residual_block_forward.5} parent=11 // pred_region
        _
      $region16: #{residual_block_forward.5} parent=11 // pred_fallthru
        _
      // Predicated region
      $region17: #{residual_block_forward.5} parent=11 // pred_check
        %p148 = pneg %p104
      $region18: #{residual_block_forward.5} parent=11 // pred_check_branch
        %150 = sbr.rel (%p148) target = $region20
      $region19: #{residual_block_forward.5} parent=11 // pred_region
        _
      $region20: #{residual_block_forward.5} parent=11 // pred_fallthru
        _
    $region12: #{residual_block_forward.5} parent=5 // pred_fallthru
      _
    %p151 = scmp.lt.s32.totalorder %s10, 2
    // Predicated region
    $region21: #{residual_block_forward.5} parent=5 // pred_check
      %p152 = pneg %p151
    $region22: #{residual_block_forward.5} parent=5 // pred_check_branch
      %154 = sbr.rel (%p152) target = $region24
    $region23: #{residual_block_forward.5} parent=5 // pred_region
      // Predicated region
      $region25: #{residual_block_forward.5} parent=23 // pred_check
        %p155 = pneg %p30
      $region26: #{residual_block_forward.5} parent=23 // pred_check_branch
        %157 = sbr.rel (%p155) target = $region28
      $region27: #{residual_block_forward.5} parent=23 // pred_region
        %p158 = scmp.lt.s32.totalorder %s10, 1
        %s159 = scalar_select %p158, %s10, 1
        %s160 = smul.addr %s159, 2
        %s161 = smul.addr %s160, 8
        %s162 = scalar_lea.vmem %s0, %s161
      $region28: #{residual_block_forward.5} parent=23 // pred_fallthru
        _
      // Predicated region
      $region29: #{residual_block_forward.5} parent=23 // pred_check
        %p163 = pneg %p56
      $region30: #{residual_block_forward.5} parent=23 // pred_check_branch
        %165 = sbr.rel (%p163) target = $region32
      $region31: #{residual_block_forward.5} parent=23 // pred_region
        %p166 = scmp.lt.s32.totalorder %s10, 1
        %s167 = scalar_select %p166, %s10, 1
        %s168 = smul.addr %s167, 2
        %s169 = smul.addr %s168, 4
        %s170 = scalar_lea.vmem %s1, %s169
      $region32: #{residual_block_forward.5} parent=23 // pred_fallthru
        _
    $region24: #{residual_block_forward.5} parent=5 // pred_fallthru
      _
    %p171 = scmp.le.s32.totalorder 1, %s10
    %p172 = scmp.lt.s32.totalorder %s10, 3
    %p173 = pnand %p171, %p172
    %p174 = pneg %p173
    // Predicated region
    $region33: #{residual_block_forward.5} parent=5 // pred_check
      _
    $region34: #{residual_block_forward.5} parent=5 // pred_check_branch
      %176 = sbr.rel (%p173) target = $region36
    $region35: #{residual_block_forward.5} parent=5 // pred_region
      %s177 = ssub.s32 %s10, 1
      %p178 = scmp.lt.s32.totalorder %s15, 1
      %s179 = scalar_select %p178, %s15, 1
      %s180 = smul.addr %s179, 2
      %s181 = smul.addr %s180, 8
      %s182 = scalar_lea.vmem %s0, %s181
      %p183 = pneg %p36
      %p184 = pneg %p33
      %p185 = scmp.lt.s32.totalorder %s15, 1
      %s186 = scalar_select %p185, %s15, 1
      %s187 = smul.addr %s186, 2
      %s188 = smul.addr %s187, 4
      %s189 = scalar_lea.vmem %s1, %s188
      %p190 = pneg %p62
      %p191 = pneg %p59
      %p192 = pneg %p83
      %p193 = pneg %p80
      %p194 = pneg %p104
      %p195 = pneg %p101
      %p196 = pneg %p130
      %p197 = pneg %p127
      %p198 = scmp.lt.s32.totalorder %s15, 1
      %s199 = scalar_select %p198, %s15, 1
      %s200 = smul.addr %s199, 2
      %s201 = smul.addr %s200, 8
      %s202 = scalar_lea.vmem %s4, %s201
      %p203 = scmp.lt.s32.totalorder %s15, 1
      %s204 = scalar_select %p203, %s15, 1
      %s205 = smul.addr %s204, 2
      %s206 = smul.addr %s205, 8
      %s207 = scalar_lea.vmem %s0, %s206
      %p208 = scmp.lt.s32.totalorder %s15, 1
      %s209 = scalar_select %p208, %s15, 1
      %s210 = smul.addr %s209, 2
      %s211 = smul.addr %s210, 4
      %s212 = scalar_lea.vmem %s1, %s211
      %p213 = scmp.lt.s32.totalorder %s15, 1
      %s214 = scalar_select %p213, %s15, 1
      %s215 = smul.addr %s214, 2
      %s216 = smul.addr %s215, 8
      %s217 = scalar_lea.vmem %s4, %s216
      %v218 = vld [vmem:[%s2] sm:$0x1]
      %v219 = vld [vmem:[%s3] sm:$0x1]
      %v220 = vld [vmem:[%s212] sm:$0xf]
      %v221 = vld [vmem:[%s212 + $0x4] sm:$0xf]
      %v222 = vunpack.c.l.bf16 %v220
      %v223 = vunpack.c.l.bf16 %v221
      %v225 = vlaneseq
      %v226 = vshrl.u32 %v225, 7
      %v227 = vsub.s32 0, %v226
      %v228 = vrot.slane %v218, %v227
      %v230 = vmul.f32 %v222, %v228
      %v231 = vmul.f32 %v223, %v228
      %v233 = vlaneseq
      %v234 = vshrl.u32 %v233, 7
      %v235 = vsub.s32 0, %v234
      %v236 = vrot.slane %v219, %v235
      %v238 = vadd.f32 %v230, %v236
      %v239 = vadd.f32 %v231, %v236
      %v240 = vmax.f32 %v238, 0.0
      %v241 = vmax.f32 %v239, 0.0
      %v242 = vld [vmem:[%s207] sm:$0xff]
      %v243 = vld [vmem:[%s207 + $0x8] sm:$0xff]
      %v244 = vadd.f32 %v242, %v240
      %v245 = vadd.f32 %v243, %v241
      %v246 = vmax.f32 %v244, 0.0
      %v247 = vmax.f32 %v245, 0.0
      %248 = vst [vmem:[%s217] sm:$0xff] %v246
      %249 = vst [vmem:[%s217 + $0x8] sm:$0xff] %v247
      %p250 = scmp.lt.s32.totalorder %s15, 1
      %s251 = scalar_select %p250, %s15, 1
      %s252 = smul.addr %s251, 2
      %s253 = smul.addr %s252, 8
      %s254 = scalar_lea.vmem %s4, %s253
      // Predicated region
      $region37: #{residual_block_forward.5} parent=35 // pred_check
        %p255 = pneg %p127
      $region38: #{residual_block_forward.5} parent=35 // pred_check_branch
        %257 = sbr.rel (%p255) target = $region40
      $region39: #{residual_block_forward.5} parent=35 // pred_region
        _
      $region40: #{residual_block_forward.5} parent=35 // pred_fallthru
        _
    $region36: #{residual_block_forward.5} parent=5 // pred_fallthru
      _
    %p258 = scmp.le.s32.totalorder 2, %s10
    // Predicated region
    $region41: #{residual_block_forward.5} parent=5 // pred_check
      %p259 = pneg %p258
    $region42: #{residual_block_forward.5} parent=5 // pred_check_branch
      %261 = sbr.rel (%p259) target = $region44
    $region43: #{residual_block_forward.5} parent=5 // pred_region
      %s262 = ssub.s32 %s10, 2
      // Predicated region
      $region45: #{residual_block_forward.5} parent=43 // pred_check
        %p263 = pneg %p133
      $region46: #{residual_block_forward.5} parent=43 // pred_check_branch
        %265 = sbr.rel (%p263) target = $region48
      $region47: #{residual_block_forward.5} parent=43 // pred_region
        %p266 = scmp.lt.s32.totalorder %s16, 1
        %s267 = scalar_select %p266, %s16, 1
        %s268 = smul.addr %s267, 2
        %s269 = smul.addr %s268, 8
        %s270 = scalar_lea.vmem %s4, %s269
      $region48: #{residual_block_forward.5} parent=43 // pred_fallthru
        _
    $region44: #{residual_block_forward.5} parent=5 // pred_fallthru
      _
  $region6: #{residual_block_forward.5} parent=0 // loop_footer
    %s14 = sadd.s32 1, %s10
  $region7: #{residual_block_forward.5} parent=0 // loop_footer_branch
    %9 = sbr.rel target = $region3
  $region8: #{residual_block_forward.5} parent=0 // loop_exit
    _

// kernel: residual_block_forward.4
$region0: #{residual_block_forward.4}
  #allocation0 [shape = 'u32[]', space=smem, size = 0x4, offset = 0x4, fixed_abs, tag = 'smem constant byte address 0x4 - core index']
  #allocation1 [shape = 'u32[144,128]{1,0:T(1,128)}', space=vmem, size = 0x12000, scoped, tag = 'internal scratch']
  #allocation2 [shape = 'f32[1,18,128]{2,1,0:T(8,128)}', space=vmem, size = 0x3000, scoped, tag = 'scratch operand']
  %s0 = inlined_call_operand.vmem [shape: bf16[2,16,128], index: 0, kind: input, shape index: {}]
  %s1 = inlined_call_operand.vmem [shape: f32[1,128], index: 1, kind: input, shape index: {}]
  %s2 = inlined_call_operand.vmem [shape: f32[1,128], index: 2, kind: input, shape index: {}]
  %s3 = inlined_call_operand.vmem [shape: bf16[3,128,128], index: 3, kind: input, shape index: {}]
  %s4 = inlined_call_operand.vmem [shape: bf16[2,16,128], index: 4, kind: output, shape index: {0}]
  %s5 = inlined_call_operand.vmem [shape: f32[2,2,128], index: 5, kind: output, shape index: {1}]
  %6 = xla_tuple %s4, %s5
  %s7 = sld [smem:[#allocation0]]
  $region57: #{residual_block_forward.4} parent=0
    _
  %s9 = ssub.s32 1, %s7
  %s10 = scalar_select 0, %s9, %s7
  loop: start=0, step=1, limit=4
  $region2: #{residual_block_forward.4} parent=0 // loop_pre_header
    _
  $region3: #{residual_block_forward.4} parent=0 // loop_header
    %s12 = sphi 0, %s16
    %p13 = scmp.ge.s32.totalorder %s12, 4
    %s22 = sphi 0, %s24
    %s25 = sphi 0, %s22
    %s26 = sphi 0, %s25
    %s42 = sphi 0, %s26
    %s46 = sphi 0, %s46
    %s48 = sphi 0, %s46
    %s49 = sphi 0, %s48
    %s63 = sphi 0, %s49
    %s67 = sphi 0, %s67
    %s69 = sphi 0, %s67
    %s70 = sphi 0, %s69
    %s84 = sphi 0, %s70
    %s88 = sphi 0, %s88
    %s90 = sphi 0, %s88
    %s91 = sphi 0, %s90
    %s105 = sphi 0, %s91
    %s111 = sphi 0, %s113
    %s114 = sphi 0, %s111
    %s115 = sphi 0, %s114
    %s131 = sphi 0, %s115
    %s137 = sphi 0, %s139
    %s140 = sphi 0, %s137
    %s141 = sphi 0, %s140
    %s157 = sphi 0, %s141
  $region4: #{residual_block_forward.4} parent=0 // loop_header_branch
    %15 = sbr.rel (%p13) target = $region8
  $region5: #{residual_block_forward.4} parent=0 // loop_body
    %s17 = ssub.s32 %s12, 1
    %s18 = ssub.s32 %s12, 2
    %s19 = sadd.s32 %s12, 1
    %s20 = ssub.s32 %s12, %s19
    %p21 = scmp.eq.s32.totalorder %s20, 0
    %s23 = sadd.s32 %s22, 1
    %s24 = scalar_select %p21, %s22, %s23
    %p27 = pneg %p21
    %p28 = scmp.eq.s32.totalorder %s12, 1
    %p29 = por %p27, %p28
    %p30 = scmp.ne.s32.totalorder %s22, %s25
    %p31 = scmp.eq.s32.totalorder %s12, 0
    %p32 = por %p30, %p31
    %p33 = scmp.ne.s32.totalorder %s22, %s25
    %p34 = scmp.eq.s32.totalorder %s17, 1
    %p35 = por %p33, %p34
    %p36 = scmp.ne.s32.totalorder %s25, %s26
    %p37 = scmp.eq.s32.totalorder %s17, 0
    %p38 = por %p36, %p37
    %p39 = scmp.ne.s32.totalorder %s25, %s26
    %p40 = scmp.eq.s32.totalorder %s18, 1
    %p41 = por %p39, %p40
    %p43 = scmp.ne.s32.totalorder %s26, %s42
    %p44 = scmp.eq.s32.totalorder %s18, 0
    %p45 = por %p43, %p44
    %s47 = sadd.s32 %s46, 1
    %p50 = scmp.eq.s32.totalorder %s12, 1
    %p51 = scmp.ne.s32.totalorder %s46, %s48
    %p52 = scmp.eq.s32.totalorder %s12, 0
    %p53 = por %p51, %p52
    %p54 = scmp.ne.s32.totalorder %s46, %s48
    %p55 = scmp.eq.s32.totalorder %s17, 1
    %p56 = por %p54, %p55
    %p57 = scmp.ne.s32.totalorder %s48, %s49
    %p58 = scmp.eq.s32.totalorder %s17, 0
    %p59 = por %p57, %p58
    %p60 = scmp.ne.s32.totalorder %s48, %s49
    %p61 = scmp.eq.s32.totalorder %s18, 1
    %p62 = por %p60, %p61
    %p64 = scmp.ne.s32.totalorder %s49, %s63
    %p65 = scmp.eq.s32.totalorder %s18, 0
    %p66 = por %p64, %p65
    %s68 = sadd.s32 %s67, 1
    %p71 = scmp.eq.s32.totalorder %s12, 1
    %p72 = scmp.ne.s32.totalorder %s67, %s69
    %p73 = scmp.eq.s32.totalorder %s12, 0
    %p74 = por %p72, %p73
    %p75 = scmp.ne.s32.totalorder %s67, %s69
    %p76 = scmp.eq.s32.totalorder %s17, 1
    %p77 = por %p75, %p76
    %p78 = scmp.ne.s32.totalorder %s69, %s70
    %p79 = scmp.eq.s32.totalorder %s17, 0
    %p80 = por %p78, %p79
    %p81 = scmp.ne.s32.totalorder %s69, %s70
    %p82 = scmp.eq.s32.totalorder %s18, 1
    %p83 = por %p81, %p82
    %p85 = scmp.ne.s32.totalorder %s70, %s84
    %p86 = scmp.eq.s32.totalorder %s18, 0
    %p87 = por %p85, %p86
    %s89 = sadd.s32 %s88, 1
    %p92 = scmp.eq.s32.totalorder %s12, 1
    %p93 = scmp.ne.s32.totalorder %s88, %s90
    %p94 = scmp.eq.s32.totalorder %s12, 0
    %p95 = por %p93, %p94
    %p96 = scmp.ne.s32.totalorder %s88, %s90
    %p97 = scmp.eq.s32.totalorder %s17, 1
    %p98 = por %p96, %p97
    %p99 = scmp.ne.s32.totalorder %s90, %s91
    %p100 = scmp.eq.s32.totalorder %s17, 0
    %p101 = por %p99, %p100
    %p102 = scmp.ne.s32.totalorder %s90, %s91
    %p103 = scmp.eq.s32.totalorder %s18, 1
    %p104 = por %p102, %p103
    %p106 = scmp.ne.s32.totalorder %s91, %s105
    %p107 = scmp.eq.s32.totalorder %s18, 0
    %p108 = por %p106, %p107
    %s109 = ssub.s32 %s12, %s19
    %p110 = scmp.eq.s32.totalorder %s109, 0
    %s112 = sadd.s32 %s111, 1
    %s113 = scalar_select %p110, %s111, %s112
    %p116 = pneg %p110
    %p117 = scmp.eq.s32.totalorder %s12, 1
    %p118 = por %p116, %p117
    %p119 = scmp.ne.s32.totalorder %s111, %s114
    %p120 = scmp.eq.s32.totalorder %s12, 0
    %p121 = por %p119, %p120
    %p122 = scmp.ne.s32.totalorder %s111, %s114
    %p123 = scmp.eq.s32.totalorder %s17, 1
    %p124 = por %p122, %p123
    %p125 = scmp.ne.s32.totalorder %s114, %s115
    %p126 = scmp.eq.s32.totalorder %s17, 0
    %p127 = por %p125, %p126
    %p128 = scmp.ne.s32.totalorder %s114, %s115
    %p129 = scmp.eq.s32.totalorder %s18, 1
    %p130 = por %p128, %p129
    %p132 = scmp.ne.s32.totalorder %s115, %s131
    %p133 = scmp.eq.s32.totalorder %s18, 0
    %p134 = por %p132, %p133
    %s135 = ssub.s32 %s12, %s19
    %p136 = scmp.eq.s32.totalorder %s135, 0
    %s138 = sadd.s32 %s137, 1
    %s139 = scalar_select %p136, %s137, %s138
    %p142 = pneg %p136
    %p143 = scmp.eq.s32.totalorder %s12, 1
    %p144 = por %p142, %p143
    %p145 = scmp.ne.s32.totalorder %s137, %s140
    %p146 = scmp.eq.s32.totalorder %s12, 0
    %p147 = por %p145, %p146
    %p148 = scmp.ne.s32.totalorder %s137, %s140
    %p149 = scmp.eq.s32.totalorder %s17, 1
    %p150 = por %p148, %p149
    %p151 = scmp.ne.s32.totalorder %s140, %s141
    %p152 = scmp.eq.s32.totalorder %s17, 0
    %p153 = por %p151, %p152
    %p154 = scmp.ne.s32.totalorder %s140, %s141
    %p155 = scmp.eq.s32.totalorder %s18, 1
    %p156 = por %p154, %p155
    %p158 = scmp.ne.s32.totalorder %s141, %s157
    %p159 = scmp.eq.s32.totalorder %s18, 0
    %p160 = por %p158, %p159
    %p161 = scmp.le.s32.totalorder 1, %s12
    %p162 = scmp.lt.s32.totalorder %s12, 3
    %p163 = pnand %p161, %p162
    %p164 = pneg %p163
    // Predicated region
    $region9: #{residual_block_forward.4} parent=5 // pred_check
      _
    $region10: #{residual_block_forward.4} parent=5 // pred_check_branch
      %166 = sbr.rel (%p163) target = $region12
    $region11: #{residual_block_forward.4} parent=5 // pred_region
      %s167 = ssub.s32 %s12, 1
      // Predicated region
      $region13: #{residual_block_forward.4} parent=11 // pred_check
        %p168 = pneg %p59
      $region14: #{residual_block_forward.4} parent=11 // pred_check_branch
        %170 = sbr.rel (%p168) target = $region16
      $region15: #{residual_block_forward.4} parent=11 // pred_region
        _
      $region16: #{residual_block_forward.4} parent=11 // pred_fallthru
        _
      // Predicated region
      $region17: #{residual_block_forward.4} parent=11 // pred_check
        %p171 = pneg %p80
      $region18: #{residual_block_forward.4} parent=11 // pred_check_branch
        %173 = sbr.rel (%p171) target = $region20
      $region19: #{residual_block_forward.4} parent=11 // pred_region
        _
      $region20: #{residual_block_forward.4} parent=11 // pred_fallthru
        _
      // Predicated region
      $region21: #{residual_block_forward.4} parent=11 // pred_check
        %p174 = pneg %p101
      $region22: #{residual_block_forward.4} parent=11 // pred_check_branch
        %176 = sbr.rel (%p174) target = $region24
      $region23: #{residual_block_forward.4} parent=11 // pred_region
        _
      $region24: #{residual_block_forward.4} parent=11 // pred_fallthru
        _
    $region12: #{residual_block_forward.4} parent=5 // pred_fallthru
      _
    %p177 = scmp.lt.s32.totalorder %s12, 2
    // Predicated region
    $region25: #{residual_block_forward.4} parent=5 // pred_check
      %p178 = pneg %p177
    $region26: #{residual_block_forward.4} parent=5 // pred_check_branch
      %180 = sbr.rel (%p178) target = $region28
    $region27: #{residual_block_forward.4} parent=5 // pred_region
      // Predicated region
      $region29: #{residual_block_forward.4} parent=27 // pred_check
        %p181 = pneg %p32
      $region30: #{residual_block_forward.4} parent=27 // pred_check_branch
        %183 = sbr.rel (%p181) target = $region32
      $region31: #{residual_block_forward.4} parent=27 // pred_region
        %p184 = scmp.lt.s32.totalorder %s12, 1
        %s185 = scalar_select %p184, %s12, 1
        %s186 = smul.addr %s185, 2
        %s187 = smul.addr %s186, 4
        %s188 = scalar_lea.vmem %s0, %s187
      $region32: #{residual_block_forward.4} parent=27 // pred_fallthru
        _
    $region28: #{residual_block_forward.4} parent=5 // pred_fallthru
      _
    %p189 = scmp.le.s32.totalorder 1, %s12
    %p190 = scmp.lt.s32.totalorder %s12, 3
    %p191 = pnand %p189, %p190
    %p192 = pneg %p191
    // Predicated region
    $region33: #{residual_block_forward.4} parent=5 // pred_check
      _
    $region34: #{residual_block_forward.4} parent=5 // pred_check_branch
      %194 = sbr.rel (%p191) target = $region36
    $region35: #{residual_block_forward.4} parent=5 // pred_region
      %s195 = ssub.s32 %s12, 1
      %p196 = scmp.lt.s32.totalorder %s17, 1
      %s197 = scalar_select %p196, %s17, 1
      %s198 = smul.addr %s197, 2
      %s199 = smul.addr %s198, 4
      %s200 = scalar_lea.vmem %s0, %s199
      %p201 = pneg %p38
      %p202 = pneg %p35
      %p203 = pneg %p59
      %p204 = pneg %p56
      %p205 = pneg %p80
      %p206 = pneg %p77
      %p207 = pneg %p101
      %p208 = pneg %p98
      %p209 = pneg %p127
      %p210 = pneg %p124
      %p211 = scmp.lt.s32.totalorder %s17, 1
      %s212 = scalar_select %p211, %s17, 1
      %s213 = smul.addr %s212, 2
      %s214 = smul.addr %s213, 4
      %s215 = scalar_lea.vmem %s4, %s214
      %p216 = pneg %p153
      %p217 = pneg %p150
      %p218 = scmp.lt.s32.totalorder %s17, 1
      %s219 = scalar_select %p218, %s17, 1
      %s220 = smul.addr %s219, 2
      %s221 = scalar_lea.vmem %s5, %s220
      %p222 = scmp.lt.s32.totalorder %s17, 1
      %s223 = scalar_select %p222, %s17, 1
      %s224 = smul.addr %s223, 2
      %s225 = smul.addr %s224, 4
      %s226 = scalar_lea.vmem %s0, %s225
      %p227 = scmp.lt.s32.totalorder %s17, 1
      %s228 = scalar_select %p227, %s17, 1
      %s229 = smul.addr %s228, 2
      %s230 = smul.addr %s229, 4
      %s231 = scalar_lea.vmem %s4, %s230
      %p232 = scmp.lt.s32.totalorder %s17, 1
      %s233 = scalar_select %p232, %s17, 1
      %s234 = smul.addr %s233, 2
      %s235 = scalar_lea.vmem %s5, %s234
      %v237 = vld [vmem:[%s1] sm:$0x1]
      %v238 = vld [vmem:[%s2] sm:$0x1]
      %v239 = vld [vmem:[%s226] sm:$0xf]
      %v240 = vld [vmem:[%s226 + $0x4] sm:$0xf]
      %v241 = vunpack.c.l.bf16 %v239
      %v242 = vunpack.c.l.bf16 %v240
      %v244 = vlaneseq
      %v245 = vshrl.u32 %v244, 7
      %v246 = vsub.s32 0, %v245
      %v247 = vrot.slane %v237, %v246
      %v249 = vmul.f32 %v241, %v247
      %v250 = vmul.f32 %v242, %v247
      %v252 = vlaneseq
      %v253 = vshrl.u32 %v252, 7
      %v254 = vsub.s32 0, %v253
      %v255 = vrot.slane %v238, %v254
      %v257 = vadd.f32 %v249, %v255
      %v258 = vadd.f32 %v250, %v255
      %v259 = vmax.f32 %v257, 0.0
      %v260 = vmax.f32 %v258, 0.0
      %261 = vst [vmem:[#allocation2] sm:$0x1] 0.0
      %262 = vst [vmem:[#allocation2 + $0x11] sm:$0x1] 0.0
      %263 = vst [vmem:[#allocation2 + $0x1] sm:$0xff] %v259
      %264 = vst [vmem:[#allocation2 + $0x9] sm:$0xff] %v260
      %v265 = vld [vmem:[#allocation2] sm:$0xff]
      %v266 = vld [vmem:[#allocation2 + $0x8] sm:$0xff]
      %v267 = vpack.c.bf16 %v266, %v265
      %v268 = vld [vmem:[%s3] sm:$0xf]
      %v269 = vld [vmem:[%s3 + $0x4] sm:$0xf]
      %v270 = vld [vmem:[%s3 + $0x8] sm:$0xf]
      %v271 = vld [vmem:[%s3 + $0xc] sm:$0xf]
      %v272 = vld [vmem:[%s3 + $0x10] sm:$0xf]
      %v273 = vld [vmem:[%s3 + $0x14] sm:$0xf]
      %v274 = vld [vmem:[%s3 + $0x18] sm:$0xf]
      %v275 = vld [vmem:[%s3 + $0x1c] sm:$0xf]
      %v276 = vld [vmem:[%s3 + $0x20] sm:$0xf]
      %v277 = vld [vmem:[%s3 + $0x24] sm:$0xf]
      %v278 = vld [vmem:[%s3 + $0x28] sm:$0xf]
      %v279 = vld [vmem:[%s3 + $0x2c] sm:$0xf]
      %v280 = vld [vmem:[%s3 + $0x30] sm:$0xf]
      %v281 = vld [vmem:[%s3 + $0x34] sm:$0xf]
      %v282 = vld [vmem:[%s3 + $0x38] sm:$0xf]
      %v283 = vld [vmem:[%s3 + $0x3c] sm:$0xf]
      %v284 = vld [vmem:[#allocation2 + $0x1] sm:$0xff]
      %v285 = vld [vmem:[#allocation2 + $0x9] sm:$0xff]
      %v286 = vpack.c.bf16 %v285, %v284
      %s287 = scalar_lea.vmem %s3, 64
      %v288 = vld [vmem:[%s287] sm:$0xf]
      %v289 = vld [vmem:[%s287 + $0x4] sm:$0xf]
      %v290 = vld [vmem:[%s287 + $0x8] sm:$0xf]
      %v291 = vld [vmem:[%s287 + $0xc] sm:$0xf]
      %v292 = vld [vmem:[%s287 + $0x10] sm:$0xf]
      %v293 = vld [vmem:[%s287 + $0x14] sm:$0xf]
      %v294 = vld [vmem:[%s287 + $0x18] sm:$0xf]
      %v295 = vld [vmem:[%s287 + $0x1c] sm:$0xf]
      %v296 = vld [vmem:[%s287 + $0x20] sm:$0xf]
      %v297 = vld [vmem:[%s287 + $0x24] sm:$0xf]
      %v298 = vld [vmem:[%s287 + $0x28] sm:$0xf]
      %v299 = vld [vmem:[%s287 + $0x2c] sm:$0xf]
      %v300 = vld [vmem:[%s287 + $0x30] sm:$0xf]
      %v301 = vld [vmem:[%s287 + $0x34] sm:$0xf]
      %v302 = vld [vmem:[%s287 + $0x38] sm:$0xf]
      %v303 = vld [vmem:[%s287 + $0x3c] sm:$0xf]
      %v320 = vunpack.c.l.b16 %v288
      %v321 = vunpack.c.l.b16 %v289
      %v322 = vunpack.c.l.b16 %v290
      %v323 = vunpack.c.l.b16 %v291
      %v324 = vunpack.c.l.b16 %v292
      %v325 = vunpack.c.l.b16 %v293
      %v326 = vunpack.c.l.b16 %v294
      %v327 = vunpack.c.l.b16 %v295
      %v328 = vunpack.c.l.b16 %v296
      %v329 = vunpack.c.l.b16 %v297
      %v330 = vunpack.c.l.b16 %v298
      %v331 = vunpack.c.l.b16 %v299
      %v332 = vunpack.c.l.b16 %v300
      %v333 = vunpack.c.l.b16 %v301
      %v334 = vunpack.c.l.b16 %v302
      %v335 = vunpack.c.l.b16 %v303
      %v336 = vpack.c.b16 %v321, %v320
      %v337 = vpack.c.b16 %v323, %v322
      %v338 = vpack.c.b16 %v325, %v324
      %v339 = vpack.c.b16 %v327, %v326
      %v340 = vpack.c.b16 %v329, %v328
      %v341 = vpack.c.b16 %v331, %v330
      %v342 = vpack.c.b16 %v333, %v332
      %v343 = vpack.c.b16 %v335, %v334
      %352 = vmatprep.subr.bf16.mxu0 0
      %353 = vmatpush1.bf16.msra.mxu0 %v343
      %354 = vmatprep.subr.bf16.mxu0 0
      %355 = vmatpush1.bf16.msra.mxu0 %v342
      %356 = vmatprep.subr.bf16.mxu0 0
      %357 = vmatpush1.bf16.msra.mxu0 %v341
      %358 = vmatprep.subr.bf16.mxu0 0
      %359 = vmatpush1.bf16.msra.mxu0 %v340
      %360 = vmatprep.subr.bf16.mxu0 0
      %361 = vmatpush1.bf16.msra.mxu0 %v339
      %362 = vmatprep.subr.bf16.mxu0 0
      %363 = vmatpush1.bf16.msra.mxu0 %v338
      %364 = vmatprep.subr.bf16.mxu0 0
      %365 = vmatpush1.bf16.msra.mxu0 %v337
      %366 = vmatprep.subr.bf16.mxu0 0
      %367 = vmatpush1.bf16.msra.mxu0 %v336
      %368 = vmatprep.subr.bf16.mxu0 0
      %369 = vmatpush2.bf16.msra.mxu0 0
      %370 = vmatprep.subr.bf16.mxu0 0
      %371 = vmatpush2.bf16.msra.mxu0 0
      %372 = vmatprep.subr.bf16.mxu0 0
      %373 = vmatpush2.bf16.msra.mxu0 0
      %374 = vmatprep.subr.bf16.mxu0 0
      %375 = vmatpush2.bf16.msra.mxu0 0
      %376 = vmatprep.subr.bf16.mxu0 0
      %377 = vmatpush2.bf16.msra.mxu0 0
      %378 = vmatprep.subr.bf16.mxu0 0
      %379 = vmatpush2.bf16.msra.mxu0 0
      %380 = vmatprep.subr.bf16.mxu0 0
      %381 = vmatpush2.bf16.msra.mxu0 0
      %382 = vmatprep.subr.bf16.mxu0 0
      %383 = vmatpush2.bf16.msra.mxu0 0
      %384 = vmatprep.mubr.bf16.mxu0 0
      %385 = vmatmul.mubr.bf16.gmra.mxu0 %v286
      %v386 = vpop.f32.mrf.mxu0
      %v387 = vadd.f32 0.0, %v386
      %v388 = vpop.f32.mrf.mxu0
      %v389 = vpop.f32.mrf.mxu0
      %v390 = vadd.f32 0.0, %v389
      %v391 = vpop.f32.mrf.mxu0
      %392 = vdwg.mxu0
      %v409 = vunpack.c.l.b16 %v268
      %v410 = vunpack.c.l.b16 %v269
      %v411 = vunpack.c.l.b16 %v270
      %v412 = vunpack.c.l.b16 %v271
      %v413 = vunpack.c.l.b16 %v272
      %v414 = vunpack.c.l.b16 %v273
      %v415 = vunpack.c.l.b16 %v274
      %v416 = vunpack.c.l.b16 %v275
      %v417 = vunpack.c.l.b16 %v276
      %v418 = vunpack.c.l.b16 %v277
      %v419 = vunpack.c.l.b16 %v278
      %v420 = vunpack.c.l.b16 %v279
      %v421 = vunpack.c.l.b16 %v280
      %v422 = vunpack.c.l.b16 %v281
      %v423 = vunpack.c.l.b16 %v282
      %v424 = vunpack.c.l.b16 %v283
      %v425 = vpack.c.b16 %v410, %v409
      %v426 = vpack.c.b16 %v412, %v411
      %v427 = vpack.c.b16 %v414, %v413
      %v428 = vpack.c.b16 %v416, %v415
      %v429 = vpack.c.b16 %v418, %v417
      %v430 = vpack.c.b16 %v420, %v419
      %v431 = vpack.c.b16 %v422, %v421
      %v432 = vpack.c.b16 %v424, %v423
      %441 = vmatprep.subr.bf16.mxu0 0
      %442 = vmatpush1.bf16.msra.mxu0 %v432
      %443 = vmatprep.subr.bf16.mxu0 0
      %444 = vmatpush1.bf16.msra.mxu0 %v431
      %445 = vmatprep.subr.bf16.mxu0 0
      %446 = vmatpush1.bf16.msra.mxu0 %v430
      %447 = vmatprep.subr.bf16.mxu0 0
      %448 = vmatpush1.bf16.msra.mxu0 %v429
      %449 = vmatprep.subr.bf16.mxu0 0
      %450 = vmatpush1.bf16.msra.mxu0 %v428
      %451 = vmatprep.subr.bf16.mxu0 0
      %452 = vmatpush1.bf16.msra.mxu0 %v427
      %453 = vmatprep.subr.bf16.mxu0 0
      %454 = vmatpush1.bf16.msra.mxu0 %v426
      %455 = vmatprep.subr.bf16.mxu0 0
      %456 = vmatpush1.bf16.msra.mxu0 %v425
      %457 = vmatprep.subr.bf16.mxu0 0
      %458 = vmatpush2.bf16.msra.mxu0 0
      %459 = vmatprep.subr.bf16.mxu0 0
      %460 = vmatpush2.bf16.msra.mxu0 0
      %461 = vmatprep.subr.bf16.mxu0 0
      %462 = vmatpush2.bf16.msra.mxu0 0
      %463 = vmatprep.subr.bf16.mxu0 0
      %464 = vmatpush2.bf16.msra.mxu0 0
      %465 = vmatprep.subr.bf16.mxu0 0
      %466 = vmatpush2.bf16.msra.mxu0 0
      %467 = vmatprep.subr.bf16.mxu0 0
      %468 = vmatpush2.bf16.msra.mxu0 0
      %469 = vmatprep.subr.bf16.mxu0 0
      %470 = vmatpush2.bf16.msra.mxu0 0
      %471 = vmatprep.subr.bf16.mxu0 0
      %472 = vmatpush2.bf16.msra.mxu0 0
      %473 = vmatprep.mubr.bf16.mxu0 0
      %474 = vmatmul.mubr.bf16.gmra.mxu0 %v267
      %v475 = vpop.f32.mrf.mxu0
      %v476 = vadd.f32 %v387, %v475
      %v477 = vpop.f32.mrf.mxu0
      %v478 = vpop.f32.mrf.mxu0
      %v479 = vadd.f32 %v390, %v478
      %v480 = vpop.f32.mrf.mxu0
      %481 = vdwg.mxu0
      %v482 = vld [vmem:[#allocation2 + $0x2] sm:$0xff]
      %v483 = vld [vmem:[#allocation2 + $0xa] sm:$0xff]
      %v484 = vpack.c.bf16 %v483, %v482
      %s485 = scalar_lea.vmem %s3, 128
      %v486 = vld [vmem:[%s485] sm:$0xf]
      %v487 = vld [vmem:[%s485 + $0x4] sm:$0xf]
      %v488 = vld [vmem:[%s485 + $0x8] sm:$0xf]
      %v489 = vld [vmem:[%s485 + $0xc] sm:$0xf]
      %v490 = vld [vmem:[%s485 + $0x10] sm:$0xf]
      %v491 = vld [vmem:[%s485 + $0x14] sm:$0xf]
      %v492 = vld [vmem:[%s485 + $0x18] sm:$0xf]
      %v493 = vld [vmem:[%s485 + $0x1c] sm:$0xf]
      %v494 = vld [vmem:[%s485 + $0x20] sm:$0xf]
      %v495 = vld [vmem:[%s485 + $0x24] sm:$0xf]
      %v496 = vld [vmem:[%s485 + $0x28] sm:$0xf]
      %v497 = vld [vmem:[%s485 + $0x2c] sm:$0xf]
      %v498 = vld [vmem:[%s485 + $0x30] sm:$0xf]
      %v499 = vld [vmem:[%s485 + $0x34] sm:$0xf]
      %v500 = vld [vmem:[%s485 + $0x38] sm:$0xf]
      %v501 = vld [vmem:[%s485 + $0x3c] sm:$0xf]
      %v518 = vunpack.c.l.b16 %v486
      %v519 = vunpack.c.l.b16 %v487
      %v520 = vunpack.c.l.b16 %v488
      %v521 = vunpack.c.l.b16 %v489
      %v522 = vunpack.c.l.b16 %v490
      %v523 = vunpack.c.l.b16 %v491
      %v524 = vunpack.c.l.b16 %v492
      %v525 = vunpack.c.l.b16 %v493
      %v526 = vunpack.c.l.b16 %v494
      %v527 = vunpack.c.l.b16 %v495
      %v528 = vunpack.c.l.b16 %v496
      %v529 = vunpack.c.l.b16 %v497
      %v530 = vunpack.c.l.b16 %v498
      %v531 = vunpack.c.l.b16 %v499
      %v532 = vunpack.c.l.b16 %v500
      %v533 = vunpack.c.l.b16 %v501
      %v534 = vpack.c.b16 %v519, %v518
      %v535 = vpack.c.b16 %v521, %v520
      %v536 = vpack.c.b16 %v523, %v522
      %v537 = vpack.c.b16 %v525, %v524
      %v538 = vpack.c.b16 %v527, %v526
      %v539 = vpack.c.b16 %v529, %v528
      %v540 = vpack.c.b16 %v531, %v530
      %v541 = vpack.c.b16 %v533, %v532
      %550 = vmatprep.subr.bf16.mxu0 0
      %551 = vmatpush1.bf16.msra.mxu0 %v541
      %552 = vmatprep.subr.bf16.mxu0 0
      %553 = vmatpush1.bf16.msra.mxu0 %v540
      %554 = vmatprep.subr.bf16.mxu0 0
      %555 = vmatpush1.bf16.msra.mxu0 %v539
      %556 = vmatprep.subr.bf16.mxu0 0
      %557 = vmatpush1.bf16.msra.mxu0 %v538
      %558 = vmatprep.subr.bf16.mxu0 0
      %559 = vmatpush1.bf16.msra.mxu0 %v537
      %560 = vmatprep.subr.bf16.mxu0 0
      %561 = vmatpush1.bf16.msra.mxu0 %v536
      %562 = vmatprep.subr.bf16.mxu0 0
      %563 = vmatpush1.bf16.msra.mxu0 %v535
      %564 = vmatprep.subr.bf16.mxu0 0
      %565 = vmatpush1.bf16.msra.mxu0 %v534
      %566 = vmatprep.subr.bf16.mxu0 0
      %567 = vmatpush2.bf16.msra.mxu0 0
      %568 = vmatprep.subr.bf16.mxu0 0
      %569 = vmatpush2.bf16.msra.mxu0 0
      %570 = vmatprep.subr.bf16.mxu0 0
      %571 = vmatpush2.bf16.msra.mxu0 0
      %572 = vmatprep.subr.bf16.mxu0 0
      %573 = vmatpush2.bf16.msra.mxu0 0
      %574 = vmatprep.subr.bf16.mxu0 0
      %575 = vmatpush2.bf16.msra.mxu0 0
      %576 = vmatprep.subr.bf16.mxu0 0
      %577 = vmatpush2.bf16.msra.mxu0 0
      %578 = vmatprep.subr.bf16.mxu0 0
      %579 = vmatpush2.bf16.msra.mxu0 0
      %580 = vmatprep.subr.bf16.mxu0 0
      %581 = vmatpush2.bf16.msra.mxu0 0
      %582 = vmatprep.mubr.bf16.mxu0 0
      %583 = vmatmul.mubr.bf16.gmra.mxu0 %v484
      %v584 = vpop.f32.mrf.mxu0
      %v585 = vadd.f32 0.0, %v584
      %v586 = vpop.f32.mrf.mxu0
      %v587 = vpop.f32.mrf.mxu0
      %v588 = vadd.f32 0.0, %v587
      %v589 = vpop.f32.mrf.mxu0
      %590 = vdwg.mxu0
      %v591 = vadd.f32 %v476, %v585
      %v592 = vadd.f32 %v479, %v588
      %v593 = vpack.c.bf16 %v592, %v591
      %v595 = vunpack.c.l.b16 %v593
      %v596 = vunpack.c.h.b16 %v593
      %v597 = vpack.c.b16 %v595, %v595
      %v598 = vpack.c.b16 %v596, %v596
      %601 = vst [vmem:[%s231] sm:$0xf] %v597
      %602 = vst [vmem:[%s231 + $0x4] sm:$0xf] %v598
      %v603 = vadd.f32 %v591, %v592
      %v604 = vrot.slane %v603, 4
      %v605 = vadd.f32 %v603, %v604
      %v606 = vrot.slane %v605, 2
      %v607 = vadd.f32 %v605, %v606
      %v608 = vrot.slane %v607, 1
      %v609 = vadd.f32 %v607, %v608
      %610 = vst [vmem:[%s235] sm:$0x1] %v609
      %v611 = vmul.f32 %v591, %v591
      %v612 = vmul.f32 %v592, %v592
      %v613 = vadd.f32 %v611, %v612
      %v614 = vrot.slane %v613, 4
      %v615 = vadd.f32 %v613, %v614
      %v616 = vrot.slane %v615, 2
      %v617 = vadd.f32 %v615, %v616
      %v618 = vrot.slane %v617, 1
      %v619 = vadd.f32 %v617, %v618
      %620 = vst [vmem:[%s235 + $0x1] sm:$0x1] %v619
      %p621 = scmp.lt.s32.totalorder %s17, 1
      %s622 = scalar_select %p621, %s17, 1
      %s623 = smul.addr %s622, 2
      %s624 = smul.addr %s623, 4
      %s625 = scalar_lea.vmem %s4, %s624
      %p626 = scmp.lt.s32.totalorder %s17, 1
      %s627 = scalar_select %p626, %s17, 1
      %s628 = smul.addr %s627, 2
      %s629 = scalar_lea.vmem %s5, %s628
      // Predicated region
      $region37: #{residual_block_forward.4} parent=35 // pred_check
        %p630 = pneg %p124
      $region38: #{residual_block_forward.4} parent=35 // pred_check_branch
        %632 = sbr.rel (%p630) target = $region40
      $region39: #{residual_block_forward.4} parent=35 // pred_region
        _
      $region40: #{residual_block_forward.4} parent=35 // pred_fallthru
        _
      // Predicated region
      $region41: #{residual_block_forward.4} parent=35 // pred_check
        %p633 = pneg %p150
      $region42: #{residual_block_forward.4} parent=35 // pred_check_branch
        %635 = sbr.rel (%p633) target = $region44
      $region43: #{residual_block_forward.4} parent=35 // pred_region
        _
      $region44: #{residual_block_forward.4} parent=35 // pred_fallthru
        _
    $region36: #{residual_block_forward.4} parent=5 // pred_fallthru
      _
    %p636 = scmp.le.s32.totalorder 2, %s12
    // Predicated region
    $region45: #{residual_block_forward.4} parent=5 // pred_check
      %p637 = pneg %p636
    $region46: #{residual_block_forward.4} parent=5 // pred_check_branch
      %639 = sbr.rel (%p637) target = $region48
    $region47: #{residual_block_forward.4} parent=5 // pred_region
      %s640 = ssub.s32 %s12, 2
      // Predicated region
      $region49: #{residual_block_forward.4} parent=47 // pred_check
        %p641 = pneg %p130
      $region50: #{residual_block_forward.4} parent=47 // pred_check_branch
        %643 = sbr.rel (%p641) target = $region52
      $region51: #{residual_block_forward.4} parent=47 // pred_region
        %p644 = scmp.lt.s32.totalorder %s18, 1
        %s645 = scalar_select %p644, %s18, 1
        %s646 = smul.addr %s645, 2
        %s647 = smul.addr %s646, 4
        %s648 = scalar_lea.vmem %s4, %s647
      $region52: #{residual_block_forward.4} parent=47 // pred_fallthru
        _
      // Predicated region
      $region53: #{residual_block_forward.4} parent=47 // pred_check
        %p649 = pneg %p156
      $region54: #{residual_block_forward.4} parent=47 // pred_check_branch
        %651 = sbr.rel (%p649) target = $region56
      $region55: #{residual_block_forward.4} parent=47 // pred_region
        %p652 = scmp.lt.s32.totalorder %s18, 1
        %s653 = scalar_select %p652, %s18, 1
        %s654 = smul.addr %s653, 2
        %s655 = scalar_lea.vmem %s5, %s654
      $region56: #{residual_block_forward.4} parent=47 // pred_fallthru
        _
    $region48: #{residual_block_forward.4} parent=5 // pred_fallthru
      _
  $region6: #{residual_block_forward.4} parent=0 // loop_footer
    %s16 = sadd.s32 1, %s12
  $region7: #{residual_block_forward.4} parent=0 // loop_footer_branch
    %11 = sbr.rel target = $region3
  $region8: #{residual_block_forward.4} parent=0 // loop_exit
    _

</llo_original>
